<compile_context>
chip_gen: v6e
topology: v6e:2x2x1
jax: 0.10.0
libtpu: 0.0.40
codegen_flags: <defaults>
</compile_context>

<pallas_src>
import jax
import jax.numpy as jnp
from jax.experimental import pallas as pl
from jax.experimental.pallas import tpu as pltpu

# ----------------------------- model constants -------------------------------
RES_C, RES_MID = 128, 128          # lane-dense analogs of resnet dims
DENSE_C0, GROWTH = 128, 128
DENSE_C = DENSE_C0 + 2 * GROWTH    # 384
NUM_CLASSES = 7
NUM_CLASSES_PAD = 128              # fc output padded to a full lane width
TM = 256                           # stem rows per grid step

# ------------------------------ Pallas kernels --------------------------------


def _stem_kernel(p_ref, w_ref, s_ref, b_ref, w1_ref, s1_ref, b1_ref,
                 hres_ref, d0_ref, hb1_ref):
    """Fused resnet+densenet stems (one K=27 / N=256 matmul) + resnet 1x1 b1."""
    acc = jnp.dot(p_ref[...], w_ref[...], preferred_element_type=jnp.float32)
    y = jnp.maximum(acc * s_ref[...] + b_ref[...], 0.0)
    h = y[:, :RES_C].astype(jnp.bfloat16)          # resnet stem (residual src)
    hres_ref[...] = h
    d0_ref[...] = y[:, RES_C:].astype(jnp.bfloat16)  # densenet stem
    # fused 1x1 bottleneck projection on the VMEM-resident stem tile
    acc1 = jnp.dot(h, w1_ref[...], preferred_element_type=jnp.float32)
    hb1 = jnp.maximum(acc1 * s1_ref[...] + b1_ref[...], 0.0)
    hb1_ref[...] = hb1.astype(jnp.bfloat16)


def pallas_stem(patches, w_cat, s_cat, b_cat, w1, s1, b1):
    Mp, K = patches.shape
    N = w_cat.shape[1]
    c2 = lambda shape: pl.BlockSpec(shape, lambda i: (0, 0))
    # TODO(synk): at real resolutions raise TM to 512-1024 and set
    # vmem_limit_bytes (plus pipeline_mode=pl.Buffered(1) on the constant
    # weight/scale/bias operands) to stay inside v7x's 64 MiB VMEM.
    return pl.pallas_call(
        _stem_kernel,
        out_shape=(
            jax.ShapeDtypeStruct((Mp, RES_C), jnp.bfloat16),
            jax.ShapeDtypeStruct((Mp, DENSE_C0), jnp.bfloat16),
            jax.ShapeDtypeStruct((Mp, RES_MID), jnp.bfloat16),
        ),
        grid=(Mp // TM,),
        in_specs=[
            pl.BlockSpec((TM, K), lambda i: (i, 0)),
            c2((K, N)), c2((1, N)), c2((1, N)),
            c2((RES_C, RES_MID)), c2((1, RES_MID)), c2((1, RES_MID)),
        ],
        out_specs=(
            pl.BlockSpec((TM, RES_C), lambda i: (i, 0)),
            pl.BlockSpec((TM, DENSE_C0), lambda i: (i, 0)),
            pl.BlockSpec((TM, RES_MID), lambda i: (i, 0)),
        ),
        compiler_params=pltpu.CompilerParams(dimension_semantics=("parallel",)),
    )(patches, w_cat, s_cat, b_cat, w1, s1, b1)


def _res_tail_kernel(xp_ref, r_ref, w2_ref, s2_ref, b2_ref,
                     w3_ref, s3_ref, b3_ref, gap_ref):
    """3x3 conv from shifted VMEM reads -> BN/ReLU -> 1x1 -> BN + residual ->
    ReLU -> global average pool.  Only the (1, C) pooled row is stored."""
    Hp, Wp, C = xp_ref.shape[1], xp_ref.shape[2], xp_ref.shape[3]
    H, W = Hp - 2, Wp - 2
    HW = H * W
    acc = jnp.zeros((HW, w2_ref.shape[2]), jnp.float32)
    for t in range(9):
        dy, dx = divmod(t, 3)
        xt = xp_ref[0, dy:dy + H, dx:dx + W, :].reshape(HW, C)
        acc = acc + jnp.dot(xt, w2_ref[t], preferred_element_type=jnp.float32)
    y2 = jnp.maximum(acc * s2_ref[...] + b2_ref[...], 0.0).astype(jnp.bfloat16)
    acc3 = jnp.dot(y2, w3_ref[...], preferred_element_type=jnp.float32)
    res = r_ref[...].astype(jnp.float32)
    y3 = jnp.maximum(acc3 * s3_ref[...] + b3_ref[...] + res, 0.0)
    gap = jnp.sum(y3, axis=0, keepdims=True) * (1.0 / HW)   # exact f32 mean
    gap_ref[...] = gap.reshape(1, 1, -1)


def pallas_res_tail(hb1_pad, h_res, w2, s2, b2, w3, s3, b3):
    B, Hp, Wp, C = hb1_pad.shape
    HW = (Hp - 2) * (Wp - 2)
    N = w3.shape[1]
    c2 = lambda shape: pl.BlockSpec(shape, lambda i: (0, 0))
    out = pl.pallas_call(
        _res_tail_kernel,
        out_shape=jax.ShapeDtypeStruct((B, 1, N), jnp.float32),
        grid=(B,),
        in_specs=[
            pl.BlockSpec((1, Hp, Wp, C), lambda i: (i, 0, 0, 0)),
            pl.BlockSpec((HW, C), lambda i: (i, 0)),
            pl.BlockSpec((9, C, w2.shape[2]), lambda i: (0, 0, 0)),
            c2((1, w2.shape[2])), c2((1, w2.shape[2])),
            c2((C, N)), c2((1, N)), c2((1, N)),
        ],
        out_specs=pl.BlockSpec((1, 1, N), lambda i: (i, 0, 0)),
        compiler_params=pltpu.CompilerParams(dimension_semantics=("parallel",)),
    )(hb1_pad, h_res, w2, s2, b2, w3, s3, b3)
    return out.reshape(B, N)


def _dense_layer_kernel(xp_ref, w_ref, s_ref, b_ref, o_ref):
    """3x3 growth conv (shifted VMEM reads) + folded BN + ReLU, spatial output."""
    Hp, Wp, C = xp_ref.shape[1], xp_ref.shape[2], xp_ref.shape[3]
    H, W = Hp - 2, Wp - 2
    HW = H * W
    N = w_ref.shape[2]
    acc = jnp.zeros((HW, N), jnp.float32)
    for t in range(9):
        dy, dx = divmod(t, 3)
        xt = xp_ref[0, dy:dy + H, dx:dx + W, :].reshape(HW, C)
        acc = acc + jnp.dot(xt, w_ref[t], preferred_element_type=jnp.float32)
    y = jnp.maximum(acc * s_ref[...] + b_ref[...], 0.0)
    o_ref[...] = y.astype(o_ref.dtype).reshape(1, HW, N)


def pallas_dense_layer(xpad, w, s, b):
    B, Hp, Wp, C = xpad.shape
    HW = (Hp - 2) * (Wp - 2)
    N = w.shape[2]
    c2 = lambda shape: pl.BlockSpec(shape, lambda i: (0, 0))
    return pl.pallas_call(
        _dense_layer_kernel,
        out_shape=jax.ShapeDtypeStruct((B, HW, N), jnp.bfloat16),
        grid=(B,),
        in_specs=[
            pl.BlockSpec((1, Hp, Wp, C), lambda i: (i, 0, 0, 0)),
            pl.BlockSpec((9, C, N), lambda i: (0, 0, 0)),
            c2((1, N)), c2((1, N)),
        ],
        out_specs=pl.BlockSpec((1, HW, N), lambda i: (i, 0, 0)),
        compiler_params=pltpu.CompilerParams(dimension_semantics=("parallel",)),
    )(xpad, w, s, b)


def _dense_final_kernel(d0p_ref, g1p_ref, wa_ref, wb_ref, s_ref, b_ref, gap_ref):
    """3x3 conv over [d0 || g1] without the HBM concat (two inputs, two weight
    halves) + exact f32 global-average-pool of d0, g1 and g2 -> (1, 384)."""
    Hp, Wp, C = d0p_ref.shape[1], d0p_ref.shape[2], d0p_ref.shape[3]
    H, W = Hp - 2, Wp - 2
    HW = H * W
    N = wa_ref.shape[2]
    acc = jnp.zeros((HW, N), jnp.float32)
    for t in range(9):
        dy, dx = divmod(t, 3)
        xa = d0p_ref[0, dy:dy + H, dx:dx + W, :].reshape(HW, C)
        xb = g1p_ref[0, dy:dy + H, dx:dx + W, :].reshape(HW, C)
        acc = acc + jnp.dot(xa, wa_ref[t], preferred_element_type=jnp.float32)
        acc = acc + jnp.dot(xb, wb_ref[t], preferred_element_type=jnp.float32)
    g2 = jnp.maximum(acc * s_ref[...] + b_ref[...], 0.0)
    inv = 1.0 / HW
    d0c = d0p_ref[0, 1:1 + H, 1:1 + W, :].reshape(HW, C).astype(jnp.float32)
    g1c = g1p_ref[0, 1:1 + H, 1:1 + W, :].reshape(HW, C).astype(jnp.float32)
    gap = jnp.concatenate(
        [jnp.sum(d0c, axis=0, keepdims=True),
         jnp.sum(g1c, axis=0, keepdims=True),
         jnp.sum(g2, axis=0, keepdims=True)], axis=1) * inv
    gap_ref[...] = gap.reshape(1, 1, -1)


def pallas_dense_final(d0_pad, g1_pad, wa, wb, s, b):
    B, Hp, Wp, C = d0_pad.shape
    N = wa.shape[2]
    c2 = lambda shape: pl.BlockSpec(shape, lambda i: (0, 0))
    out = pl.pallas_call(
        _dense_final_kernel,
        out_shape=jax.ShapeDtypeStruct((B, 1, DENSE_C), jnp.float32),
        grid=(B,),
        in_specs=[
            pl.BlockSpec((1, Hp, Wp, C), lambda i: (i, 0, 0, 0)),
            pl.BlockSpec((1, Hp, Wp, C), lambda i: (i, 0, 0, 0)),
            pl.BlockSpec((9, C, N), lambda i: (0, 0, 0)),
            pl.BlockSpec((9, C, N), lambda i: (0, 0, 0)),
            c2((1, N)), c2((1, N)),
        ],
        out_specs=pl.BlockSpec((1, 1, DENSE_C), lambda i: (i, 0, 0)),
        compiler_params=pltpu.CompilerParams(dimension_semantics=("parallel",)),
    )(d0_pad, g1_pad, wa, wb, s, b)
    return out.reshape(B, DENSE_C)


def _head_kernel(rg_ref, dg_ref, w_ref, b_ref, o_ref):
    feats = jnp.concatenate([rg_ref[...], dg_ref[...]], axis=1).astype(jnp.bfloat16)
    o_ref[...] = (jnp.dot(feats, w_ref[...], preferred_element_type=jnp.float32)
                  + b_ref[...])


def pallas_head(resgap, densegap, w_pad, b_pad):
    B = resgap.shape[0]
    N = w_pad.shape[1]

    def full(shape):
        nd = len(shape)
        return pl.BlockSpec(shape, lambda i, nd=nd: (0,) * nd)

    return pl.pallas_call(
        _head_kernel,
        out_shape=jax.ShapeDtypeStruct((B, N), jnp.float32),
        grid=(1,),
        in_specs=[full(resgap.shape), full(densegap.shape),
                  full(w_pad.shape), full(b_pad.shape)],
        out_specs=full((B, N)),
        compiler_params=pltpu.CompilerParams(dimension_semantics=("arbitrary",)),
    )(resgap, densegap, w_pad, b_pad)


# ------------------------------ glue / forward --------------------------------


def im2col3(x):
    """3x3 SAME im2col — used ONLY for the 3-channel input stem (K=27, tiny)."""
    B, H, W, C = x.shape
    xp = jnp.pad(x, ((0, 0), (1, 1), (1, 1), (0, 0)))
    cols = [xp[:, dy:dy + H, dx:dx + W, :] for dy in range(3) for dx in range(3)]
    return jnp.concatenate(cols, axis=-1).reshape(B * H * W, 9 * C)


def pad_hw(x):
    return jnp.pad(x, ((0, 0), (1, 1), (1, 1), (0, 0)))


def forward_pallas(x_nchw, params):
    x = jnp.transpose(x_nchw, (0, 2, 3, 1)).astype(jnp.bfloat16)  # NCHW -> NHWC
    B, H, W, _ = x.shape
    M = B * H * W
    pr, pd = params["resnet"], params["densenet"]

    # ---- fused stems (resnet + densenet, N=256) + resnet 1x1 bottleneck ----
    w_rs, s_rs, b_rs = pr["stem"]
    w_ds, s_ds, b_ds = pd["stem"]
    w_cat = jnp.concatenate([w_rs, w_ds], axis=1)               # (27, 256) bf16
    s_cat = jnp.concatenate([s_rs, s_ds]).reshape(1, -1)
    b_cat = jnp.concatenate([b_rs, b_ds]).reshape(1, -1)
    w1, s1, b1 = pr["b1"]
    patches = im2col3(x)                                        # (M, 27) — tiny
    Mp = pl.cdiv(M, TM) * TM
    if Mp != M:
        patches = jnp.pad(patches, ((0, Mp - M), (0, 0)))
    h_res, d0, hb1 = pallas_stem(patches, w_cat, s_cat, b_cat,
                                 w1, s1.reshape(1, -1), b1.reshape(1, -1))
    h_res, d0, hb1 = h_res[:M], d0[:M], hb1[:M]

    # ---- resnet tail: 3x3 + 1x1 + residual + ReLU + GAP, fully fused ----
    w2, s2, b2 = pr["b2"]
    w3, s3, b3 = pr["b3"]
    hb1_pad = pad_hw(hb1.reshape(B, H, W, RES_MID))
    res_gap = pallas_res_tail(hb1_pad, h_res,
                              w2.reshape(9, RES_MID, RES_MID),
                              s2.reshape(1, -1), b2.reshape(1, -1),
                              w3, s3.reshape(1, -1), b3.reshape(1, -1))

    # ---- densenet: growth layer 1 (spatial), layer 2 + triple GAP fused ----
    wd1, sd1, bd1 = pd["d1"]
    wd2, sd2, bd2 = pd["d2"]
    d0_pad = pad_hw(d0.reshape(B, H, W, DENSE_C0))
    g1 = pallas_dense_layer(d0_pad, wd1.reshape(9, DENSE_C0, GROWTH),
                            sd1.reshape(1, -1), bd1.reshape(1, -1))
    g1_pad = pad_hw(g1.reshape(B, H, W, GROWTH))
    wd2_r = wd2.reshape(9, DENSE_C0 + GROWTH, GROWTH)
    dense_gap = pallas_dense_final(d0_pad, g1_pad,
                                   wd2_r[:, :DENSE_C0, :], wd2_r[:, DENSE_C0:, :],
                                   sd2.reshape(1, -1), bd2.reshape(1, -1))

    # ---- head: cat(gap_res, gap_dense) @ W_fc (padded to 128 lanes) + b ----
    w_fc, b_fc = params["fc"]
    w_pad = jnp.zeros((w_fc.shape[0], NUM_CLASSES_PAD), jnp.float32)
    w_pad = w_pad.at[:, :NUM_CLASSES].set(w_fc).astype(jnp.bfloat16)
    b_pad = jnp.zeros((1, NUM_CLASSES_PAD), jnp.float32).at[0, :NUM_CLASSES].set(b_fc)
    logits = pallas_head(res_gap, dense_gap, w_pad, b_pad)
    return logits[:, :NUM_CLASSES]


# --------------------------- pure-JAX reference --------------------------------


def forward_ref(x_nchw, params):
    x = jnp.transpose(x_nchw, (0, 2, 3, 1)).astype(jnp.bfloat16)
    B, H, W, _ = x.shape
    HW = H * W
    pr, pd = params["resnet"], params["densenet"]

    def conv3x3(xn, w, s, b):
        cin, cout = xn.shape[-1], w.shape[-1]
        wr = w.reshape(9, cin, cout)
        xp = jnp.pad(xn, ((0, 0), (1, 1), (1, 1), (0, 0)))
        acc = jnp.zeros((B, H, W, cout), jnp.float32)
        for t in range(9):
            dy, dx = divmod(t, 3)
            acc = acc + jnp.einsum("bhwc,cn->bhwn", xp[:, dy:dy + H, dx:dx + W, :],
                                   wr[t], preferred_element_type=jnp.float32)
        return jnp.maximum(acc * s + b, 0.0)

    def mm(xn, w, s, b, extra=None):
        acc = jnp.einsum("bhwc,cn->bhwn", xn, w, preferred_element_type=jnp.float32)
        y = acc * s + b
        if extra is not None:
            y = y + extra
        return jnp.maximum(y, 0.0)

    # resnet branch
    w_rs, s_rs, b_rs = pr["stem"]
    h = conv3x3(x, w_rs, s_rs, b_rs).astype(jnp.bfloat16)
    w1, s1, b1 = pr["b1"]
    hb1 = mm(h, w1, s1, b1).astype(jnp.bfloat16)
    w2, s2, b2 = pr["b2"]
    y2 = conv3x3(hb1, w2, s2, b2).astype(jnp.bfloat16)
    w3, s3, b3 = pr["b3"]
    y3 = mm(y2, w3, s3, b3, extra=h.astype(jnp.float32))
    res_gap = jnp.mean(y3.reshape(B, HW, -1), axis=1)

    # densenet branch
    w_ds, s_ds, b_ds = pd["stem"]
    d0 = conv3x3(x, w_ds, s_ds, b_ds).astype(jnp.bfloat16)
    wd1, sd1, bd1 = pd["d1"]
    g1 = conv3x3(d0, wd1, sd1, bd1).astype(jnp.bfloat16)
    wd2, sd2, bd2 = pd["d2"]
    g2 = conv3x3(jnp.concatenate([d0, g1], axis=-1), wd2, sd2, bd2)
    dense_gap = jnp.concatenate(
        [jnp.mean(d0.astype(jnp.float32).reshape(B, HW, -1), axis=1),
         jnp.mean(g1.astype(jnp.float32).reshape(B, HW, -1), axis=1),
         jnp.mean(g2.reshape(B, HW, -1), axis=1)], axis=1)

    w_fc, b_fc = params["fc"]
    feats = jnp.concatenate([res_gap, dense_gap], axis=1).astype(jnp.bfloat16)
    return (jnp.dot(feats, w_fc.astype(jnp.bfloat16),
                    preferred_element_type=jnp.float32) + b_fc)


# --------------------------- deterministic params ------------------------------


def make_conv(key, k, cin, cout):
    kw, ks, kb = jax.random.split(key, 3)
    w = (jax.random.normal(kw, (k * k * cin, cout), jnp.float32) * 0.05
         ).astype(jnp.bfloat16)
    scale = 1.0 + 0.1 * jax.random.normal(ks, (cout,), jnp.float32)  # folded BN
    bias = 0.1 * jax.random.normal(kb, (cout,), jnp.float32)
    return (w, scale, bias)


def make_params(key):
    ks = jax.random.split(key, 9)
    return {
        "resnet": {
            "stem": make_conv(ks[0], 3, 3, RES_C),
            "b1": make_conv(ks[1], 1, RES_C, RES_MID),
            "b2": make_conv(ks[2], 3, RES_MID, RES_MID),
            "b3": make_conv(ks[3], 1, RES_MID, RES_C),
        },
        "densenet": {
            "stem": make_conv(ks[4], 3, 3, DENSE_C0),
            "d1": make_conv(ks[5], 3, DENSE_C0, GROWTH),
            "d2": make_conv(ks[6], 3, DENSE_C0 + GROWTH, GROWTH),
        },
        "fc": (
            jax.random.normal(ks[7], (RES_C + DENSE_C, NUM_CLASSES), jnp.float32) * 0.05,
            0.1 * jax.random.normal(ks[8], (NUM_CLASSES,), jnp.float32),
        ),
    }


# ----------------------------------- main --------------------------------------

if __name__ == "__main__":
    root = jax.random.PRNGKey(0)
    kp, kx = jax.random.split(root)
    params = make_params(kp)
    x = jax.random.normal(kx, (2, 3, 16, 16), jnp.float32)  # NCHW like PyTorch

    out = jax.block_until_ready(forward_pallas(x, params))
    assert out.shape == (2, NUM_CLASSES), out.shape

    ref = jax.block_until_ready(forward_ref(x, params))
    assert jnp.allclose(out, ref, atol=1e-2, rtol=1e-2), (out, ref)

    print("KERNEL_OK")
</pallas_src>

<mosaic_0001>
module attributes {stable_mosaic.version = 11 : i64} {
  func.func @_stem_kernel(%arg0: i32, %arg1: memref<256x27xbf16, #tpu.memory_space<vmem>>, %arg2: memref<27x256xbf16, #tpu.memory_space<vmem>>, %arg3: memref<1x256xf32, #tpu.memory_space<vmem>>, %arg4: memref<1x256xf32, #tpu.memory_space<vmem>>, %arg5: memref<128x128xbf16, #tpu.memory_space<vmem>>, %arg6: memref<1x128xf32, #tpu.memory_space<vmem>>, %arg7: memref<1x128xf32, #tpu.memory_space<vmem>>, %arg8: memref<256x128xbf16, #tpu.memory_space<vmem>>, %arg9: memref<256x128xbf16, #tpu.memory_space<vmem>>, %arg10: memref<256x128xbf16, #tpu.memory_space<vmem>>) attributes {dimension_semantics = [#tpu.dimension_semantics<parallel>], iteration_bounds = array<i64: 2>, scalar_prefetch = 0 : i64, scratch_operands = 0 : i64, tpu.core_type = #tpu.core_type<tc>, window_params = [{transform_indices = @transform_0, window_bounds = array<i64: 256, 27>}, {pipeline_mode = #tpu.pipeline_mode<synchronous>, transform_indices = @transform_1, window_bounds = array<i64: 27, 256>}, {pipeline_mode = #tpu.pipeline_mode<synchronous>, transform_indices = @transform_2, window_bounds = array<i64: 1, 256>}, {pipeline_mode = #tpu.pipeline_mode<synchronous>, transform_indices = @transform_3, window_bounds = array<i64: 1, 256>}, {pipeline_mode = #tpu.pipeline_mode<synchronous>, transform_indices = @transform_4, window_bounds = array<i64: 128, 128>}, {pipeline_mode = #tpu.pipeline_mode<synchronous>, transform_indices = @transform_5, window_bounds = array<i64: 1, 128>}, {pipeline_mode = #tpu.pipeline_mode<synchronous>, transform_indices = @transform_6, window_bounds = array<i64: 1, 128>}, {transform_indices = @transform_7, window_bounds = array<i64: 256, 128>}, {transform_indices = @transform_8, window_bounds = array<i64: 256, 128>}, {transform_indices = @transform_9, window_bounds = array<i64: 256, 128>}]} {
    %c0 = arith.constant 0 : index
    %c0_0 = arith.constant 0 : index
    %0 = vector.load %arg1[%c0, %c0_0] : memref<256x27xbf16, #tpu.memory_space<vmem>>, vector<256x27xbf16>
    %c0_1 = arith.constant 0 : index
    %c0_2 = arith.constant 0 : index
    %1 = vector.load %arg2[%c0_1, %c0_2] : memref<27x256xbf16, #tpu.memory_space<vmem>>, vector<27x256xbf16>
    %cst = arith.constant dense<0.000000e+00> : vector<256x256xf32>
    %2 = tpu.matmul %0, %1, %cst {dimension_numbers = #tpu.dot_dimension_numbers<[1], [0], [0], [1], [0, 0, 1, 1], [], []>} : vector<256x27xbf16>, vector<27x256xbf16>, vector<256x256xf32> -> vector<256x256xf32>
    %c0_3 = arith.constant 0 : index
    %c0_4 = arith.constant 0 : index
    %3 = vector.load %arg3[%c0_3, %c0_4] : memref<1x256xf32, #tpu.memory_space<vmem>>, vector<1x256xf32>
    %4 = vector.broadcast %3 : vector<1x256xf32> to vector<256x256xf32>
    %5 = arith.mulf %2, %4 : vector<256x256xf32>
    %c0_5 = arith.constant 0 : index
    %c0_6 = arith.constant 0 : index
    %6 = vector.load %arg4[%c0_5, %c0_6] : memref<1x256xf32, #tpu.memory_space<vmem>>, vector<1x256xf32>
    %7 = vector.broadcast %6 : vector<1x256xf32> to vector<256x256xf32>
    %8 = arith.addf %5, %7 : vector<256x256xf32>
    %cst_7 = arith.constant 0.000000e+00 : f32
    %9 = vector.broadcast %cst_7 : f32 to vector<256x256xf32>
    %10 = arith.maximumf %8, %9 : vector<256x256xf32>
    %11 = vector.extract_strided_slice %10 {offsets = [0, 0], sizes = [256, 128], strides = [1, 1]} : vector<256x256xf32> to vector<256x128xf32>
    %12 = arith.truncf %11 : vector<256x128xf32> to vector<256x128xbf16>
    %c0_8 = arith.constant 0 : index
    %c0_9 = arith.constant 0 : index
    %13 = vector.load %arg8[%c0_8, %c0_9] : memref<256x128xbf16, #tpu.memory_space<vmem>>, vector<256x128xbf16>
    tpu.vector_store %arg8[%c0_8, %c0_9], %12 {strides = array<i32>} : memref<256x128xbf16, #tpu.memory_space<vmem>>, vector<256x128xbf16>,
    %14 = vector.extract_strided_slice %10 {offsets = [0, 128], sizes = [256, 128], strides = [1, 1]} : vector<256x256xf32> to vector<256x128xf32>
    %15 = arith.truncf %14 : vector<256x128xf32> to vector<256x128xbf16>
    %c0_10 = arith.constant 0 : index
    %c0_11 = arith.constant 0 : index
    %16 = vector.load %arg9[%c0_10, %c0_11] : memref<256x128xbf16, #tpu.memory_space<vmem>>, vector<256x128xbf16>
    tpu.vector_store %arg9[%c0_10, %c0_11], %15 {strides = array<i32>} : memref<256x128xbf16, #tpu.memory_space<vmem>>, vector<256x128xbf16>,
    %c0_12 = arith.constant 0 : index
    %c0_13 = arith.constant 0 : index
    %17 = vector.load %arg5[%c0_12, %c0_13] : memref<128x128xbf16, #tpu.memory_space<vmem>>, vector<128x128xbf16>
    %cst_14 = arith.constant dense<0.000000e+00> : vector<256x128xf32>
    %18 = tpu.matmul %12, %17, %cst_14 {dimension_numbers = #tpu.dot_dimension_numbers<[1], [0], [0], [1], [0, 0, 1, 1], [], []>} : vector<256x128xbf16>, vector<128x128xbf16>, vector<256x128xf32> -> vector<256x128xf32>
    %c0_15 = arith.constant 0 : index
    %c0_16 = arith.constant 0 : index
    %19 = vector.load %arg6[%c0_15, %c0_16] : memref<1x128xf32, #tpu.memory_space<vmem>>, vector<1x128xf32>
    %20 = vector.broadcast %19 : vector<1x128xf32> to vector<256x128xf32>
    %21 = arith.mulf %18, %20 : vector<256x128xf32>
    %c0_17 = arith.constant 0 : index
    %c0_18 = arith.constant 0 : index
    %22 = vector.load %arg7[%c0_17, %c0_18] : memref<1x128xf32, #tpu.memory_space<vmem>>, vector<1x128xf32>
    %23 = vector.broadcast %22 : vector<1x128xf32> to vector<256x128xf32>
    %24 = arith.addf %21, %23 : vector<256x128xf32>
    %cst_19 = arith.constant 0.000000e+00 : f32
    %25 = vector.broadcast %cst_19 : f32 to vector<256x128xf32>
    %26 = arith.maximumf %24, %25 : vector<256x128xf32>
    %27 = arith.truncf %26 : vector<256x128xf32> to vector<256x128xbf16>
    %c0_20 = arith.constant 0 : index
    %c0_21 = arith.constant 0 : index
    %28 = vector.load %arg10[%c0_20, %c0_21] : memref<256x128xbf16, #tpu.memory_space<vmem>>, vector<256x128xbf16>
    tpu.vector_store %arg10[%c0_20, %c0_21], %27 {strides = array<i32>} : memref<256x128xbf16, #tpu.memory_space<vmem>>, vector<256x128xbf16>,
    return
  }
  func.func @transform_0(%arg0: i32) -> (i32, i32) {
    %c0_i32 = arith.constant 0 : i32
    %c0_i32_0 = arith.constant 0 : i32
    return %arg0, %c0_i32 : i32, i32
  }
  func.func @transform_1(%arg0: i32) -> (i32, i32) {
    %c0_i32 = arith.constant 0 : i32
    %c0_i32_0 = arith.constant 0 : i32
    %c0_i32_1 = arith.constant 0 : i32
    return %c0_i32, %c0_i32_0 : i32, i32
  }
  func.func @transform_2(%arg0: i32) -> (i32, i32) {
    %c0_i32 = arith.constant 0 : i32
    %c0_i32_0 = arith.constant 0 : i32
    %c0_i32_1 = arith.constant 0 : i32
    return %c0_i32, %c0_i32_0 : i32, i32
  }
  func.func @transform_3(%arg0: i32) -> (i32, i32) {
    %c0_i32 = arith.constant 0 : i32
    %c0_i32_0 = arith.constant 0 : i32
    %c0_i32_1 = arith.constant 0 : i32
    return %c0_i32, %c0_i32_0 : i32, i32
  }
  func.func @transform_4(%arg0: i32) -> (i32, i32) {
    %c0_i32 = arith.constant 0 : i32
    %c0_i32_0 = arith.constant 0 : i32
    %c0_i32_1 = arith.constant 0 : i32
    return %c0_i32, %c0_i32_0 : i32, i32
  }
  func.func @transform_5(%arg0: i32) -> (i32, i32) {
    %c0_i32 = arith.constant 0 : i32
    %c0_i32_0 = arith.constant 0 : i32
    %c0_i32_1 = arith.constant 0 : i32
    return %c0_i32, %c0_i32_0 : i32, i32
  }
  func.func @transform_6(%arg0: i32) -> (i32, i32) {
    %c0_i32 = arith.constant 0 : i32
    %c0_i32_0 = arith.constant 0 : i32
    %c0_i32_1 = arith.constant 0 : i32
    return %c0_i32, %c0_i32_0 : i32, i32
  }
  func.func @transform_7(%arg0: i32) -> (i32, i32) {
    %c0_i32 = arith.constant 0 : i32
    %c0_i32_0 = arith.constant 0 : i32
    return %arg0, %c0_i32 : i32, i32
  }
  func.func @transform_8(%arg0: i32) -> (i32, i32) {
    %c0_i32 = arith.constant 0 : i32
    %c0_i32_0 = arith.constant 0 : i32
    return %arg0, %c0_i32 : i32, i32
  }
  func.func @transform_9(%arg0: i32) -> (i32, i32) {
    %c0_i32 = arith.constant 0 : i32
    %c0_i32_0 = arith.constant 0 : i32
    return %arg0, %c0_i32 : i32, i32
  }
}

</mosaic_0001>

<llo_original>
// kernel: tpu_custom_call.1
$region0: #{tpu_custom_call.1}
  #allocation0 [shape = 'u32[]', space=smem, size = 0x4, offset = 0x4, fixed_abs, tag = 'smem constant byte address 0x4 - core index']
  #allocation1 [shape = 'u32[144,128]{1,0:T(1,128)}', space=vmem, size = 0x12000, scoped, tag = 'internal scratch']
  %s0 = inlined_call_operand.vmem [shape: bf16[512,27], index: 0, kind: input, shape index: {}]
  %s1 = inlined_call_operand.vmem [shape: bf16[27,256], index: 1, kind: input, shape index: {}]
  %s2 = inlined_call_operand.vmem [shape: f32[1,256], index: 2, kind: input, shape index: {}]
  %s3 = inlined_call_operand.vmem [shape: f32[1,256], index: 3, kind: input, shape index: {}]
  %s4 = inlined_call_operand.vmem [shape: bf16[128,128], index: 4, kind: input, shape index: {}]
  %s5 = inlined_call_operand.vmem [shape: f32[1,128], index: 5, kind: input, shape index: {}]
  %s6 = inlined_call_operand.vmem [shape: f32[1,128], index: 6, kind: input, shape index: {}]
  %s7 = inlined_call_operand.hbm [shape: bf16[512,128], index: 7, kind: output, shape index: {0}]
  %s8 = inlined_call_operand.hbm [shape: bf16[512,128], index: 8, kind: output, shape index: {1}]
  %s9 = inlined_call_operand.hbm [shape: bf16[512,128], index: 9, kind: output, shape index: {2}]
  %10 = xla_tuple %s7, %s8, %s9
  %s11 = sld [smem:[#allocation0]]
  $region77: #{tpu_custom_call.1} parent=0
    _
  %s13 = ssub.s32 1, %s11
  %s14 = scalar_select 0, %s13, %s11
  $region1: #{tpu_custom_call.1} parent=0
    #allocation2 [shape = 'u8[131072]{0}', space=vmem, size = 0x20000, scoped, tag = 'output window, operand 0']
    #allocation3 [shape = 's32[2]{0}', space=sflag, size = 0x8, scoped, tag = 'scoped memory for tpu_custom_call.1']
    #allocation4 [shape = 'u8[131072]{0}', space=vmem, size = 0x20000, scoped, tag = 'output window, operand 1']
    #allocation5 [shape = 's32[2]{0}', space=sflag, size = 0x8, scoped, tag = 'scoped memory for tpu_custom_call.1']
    #allocation6 [shape = 'u8[131072]{0}', space=vmem, size = 0x20000, scoped, tag = 'output window, operand 2']
    %15 = vsyncpa [#allocation3], 0
    %s16 = scalar_lea.sflag [#allocation3], 1
    %17 = vsyncpa %s16, 0
    %18 = vsyncpa [#allocation5], 0
    %s19 = scalar_lea.sflag [#allocation5], 1
    %20 = vsyncpa %s19, 0
    loop: start=0, step=1, limit=4
    $region2: #{tpu_custom_call.1} parent=1 // loop_pre_header
      _
    $region3: #{tpu_custom_call.1} parent=1 // loop_header
      %s22 = sphi 0, %s26
      %p23 = scmp.ge.s32.totalorder %s22, 4
      %s32 = sphi 0, %s34
      %s35 = sphi 0, %s32
      %s36 = sphi 0, %s35
      %s52 = sphi 0, %s36
      %s56 = sphi 0, %s56
      %s58 = sphi 0, %s56
      %s59 = sphi 0, %s58
      %s73 = sphi 0, %s59
      %s77 = sphi 0, %s77
      %s79 = sphi 0, %s77
      %s80 = sphi 0, %s79
      %s94 = sphi 0, %s80
      %s98 = sphi 0, %s98
      %s100 = sphi 0, %s98
      %s101 = sphi 0, %s100
      %s115 = sphi 0, %s101
      %s119 = sphi 0, %s119
      %s121 = sphi 0, %s119
      %s122 = sphi 0, %s121
      %s136 = sphi 0, %s122
      %s140 = sphi 0, %s140
      %s142 = sphi 0, %s140
      %s143 = sphi 0, %s142
      %s157 = sphi 0, %s143
      %s161 = sphi 0, %s161
      %s163 = sphi 0, %s161
      %s164 = sphi 0, %s163
      %s178 = sphi 0, %s164
      %s184 = sphi 0, %s186
      %s187 = sphi 0, %s184
      %s188 = sphi 0, %s187
      %s204 = sphi 0, %s188
      %s210 = sphi 0, %s212
      %s213 = sphi 0, %s210
      %s214 = sphi 0, %s213
      %s230 = sphi 0, %s214
      %s236 = sphi 0, %s238
      %s239 = sphi 0, %s236
      %s240 = sphi 0, %s239
      %s256 = sphi 0, %s240
    $region4: #{tpu_custom_call.1} parent=1 // loop_header_branch
      %25 = sbr.rel (%p23) target = $region8
    $region5: #{tpu_custom_call.1} parent=1 // loop_body
      %s27 = ssub.s32 %s22, 1
      %s28 = ssub.s32 %s22, 2
      %s29 = sadd.s32 %s22, 1
      %s30 = ssub.s32 %s22, %s29
      %p31 = scmp.eq.s32.totalorder %s30, 0
      %s33 = sadd.s32 %s32, 1
      %s34 = scalar_select %p31, %s32, %s33
      %p37 = pneg %p31
      %p38 = scmp.eq.s32.totalorder %s22, 1
      %p39 = por %p37, %p38
      %p40 = scmp.ne.s32.totalorder %s32, %s35
      %p41 = scmp.eq.s32.totalorder %s22, 0
      %p42 = por %p40, %p41
      %p43 = scmp.ne.s32.totalorder %s32, %s35
      %p44 = scmp.eq.s32.totalorder %s27, 1
      %p45 = por %p43, %p44
      %p46 = scmp.ne.s32.totalorder %s35, %s36
      %p47 = scmp.eq.s32.totalorder %s27, 0
      %p48 = por %p46, %p47
      %p49 = scmp.ne.s32.totalorder %s35, %s36
      %p50 = scmp.eq.s32.totalorder %s28, 1
      %p51 = por %p49, %p50
      %p53 = scmp.ne.s32.totalorder %s36, %s52
      %p54 = scmp.eq.s32.totalorder %s28, 0
      %p55 = por %p53, %p54
      %s57 = sadd.s32 %s56, 1
      %p60 = scmp.eq.s32.totalorder %s22, 1
      %p61 = scmp.ne.s32.totalorder %s56, %s58
      %p62 = scmp.eq.s32.totalorder %s22, 0
      %p63 = por %p61, %p62
      %p64 = scmp.ne.s32.totalorder %s56, %s58
      %p65 = scmp.eq.s32.totalorder %s27, 1
      %p66 = por %p64, %p65
      %p67 = scmp.ne.s32.totalorder %s58, %s59
      %p68 = scmp.eq.s32.totalorder %s27, 0
      %p69 = por %p67, %p68
      %p70 = scmp.ne.s32.totalorder %s58, %s59
      %p71 = scmp.eq.s32.totalorder %s28, 1
      %p72 = por %p70, %p71
      %p74 = scmp.ne.s32.totalorder %s59, %s73
      %p75 = scmp.eq.s32.totalorder %s28, 0
      %p76 = por %p74, %p75
      %s78 = sadd.s32 %s77, 1
      %p81 = scmp.eq.s32.totalorder %s22, 1
      %p82 = scmp.ne.s32.totalorder %s77, %s79
      %p83 = scmp.eq.s32.totalorder %s22, 0
      %p84 = por %p82, %p83
      %p85 = scmp.ne.s32.totalorder %s77, %s79
      %p86 = scmp.eq.s32.totalorder %s27, 1
      %p87 = por %p85, %p86
      %p88 = scmp.ne.s32.totalorder %s79, %s80
      %p89 = scmp.eq.s32.totalorder %s27, 0
      %p90 = por %p88, %p89
      %p91 = scmp.ne.s32.totalorder %s79, %s80
      %p92 = scmp.eq.s32.totalorder %s28, 1
      %p93 = por %p91, %p92
      %p95 = scmp.ne.s32.totalorder %s80, %s94
      %p96 = scmp.eq.s32.totalorder %s28, 0
      %p97 = por %p95, %p96
      %s99 = sadd.s32 %s98, 1
      %p102 = scmp.eq.s32.totalorder %s22, 1
      %p103 = scmp.ne.s32.totalorder %s98, %s100
      %p104 = scmp.eq.s32.totalorder %s22, 0
      %p105 = por %p103, %p104
      %p106 = scmp.ne.s32.totalorder %s98, %s100
      %p107 = scmp.eq.s32.totalorder %s27, 1
      %p108 = por %p106, %p107
      %p109 = scmp.ne.s32.totalorder %s100, %s101
      %p110 = scmp.eq.s32.totalorder %s27, 0
      %p111 = por %p109, %p110
      %p112 = scmp.ne.s32.totalorder %s100, %s101
      %p113 = scmp.eq.s32.totalorder %s28, 1
      %p114 = por %p112, %p113
      %p116 = scmp.ne.s32.totalorder %s101, %s115
      %p117 = scmp.eq.s32.totalorder %s28, 0
      %p118 = por %p116, %p117
      %s120 = sadd.s32 %s119, 1
      %p123 = scmp.eq.s32.totalorder %s22, 1
      %p124 = scmp.ne.s32.totalorder %s119, %s121
      %p125 = scmp.eq.s32.totalorder %s22, 0
      %p126 = por %p124, %p125
      %p127 = scmp.ne.s32.totalorder %s119, %s121
      %p128 = scmp.eq.s32.totalorder %s27, 1
      %p129 = por %p127, %p128
      %p130 = scmp.ne.s32.totalorder %s121, %s122
      %p131 = scmp.eq.s32.totalorder %s27, 0
      %p132 = por %p130, %p131
      %p133 = scmp.ne.s32.totalorder %s121, %s122
      %p134 = scmp.eq.s32.totalorder %s28, 1
      %p135 = por %p133, %p134
      %p137 = scmp.ne.s32.totalorder %s122, %s136
      %p138 = scmp.eq.s32.totalorder %s28, 0
      %p139 = por %p137, %p138
      %s141 = sadd.s32 %s140, 1
      %p144 = scmp.eq.s32.totalorder %s22, 1
      %p145 = scmp.ne.s32.totalorder %s140, %s142
      %p146 = scmp.eq.s32.totalorder %s22, 0
      %p147 = por %p145, %p146
      %p148 = scmp.ne.s32.totalorder %s140, %s142
      %p149 = scmp.eq.s32.totalorder %s27, 1
      %p150 = por %p148, %p149
      %p151 = scmp.ne.s32.totalorder %s142, %s143
      %p152 = scmp.eq.s32.totalorder %s27, 0
      %p153 = por %p151, %p152
      %p154 = scmp.ne.s32.totalorder %s142, %s143
      %p155 = scmp.eq.s32.totalorder %s28, 1
      %p156 = por %p154, %p155
      %p158 = scmp.ne.s32.totalorder %s143, %s157
      %p159 = scmp.eq.s32.totalorder %s28, 0
      %p160 = por %p158, %p159
      %s162 = sadd.s32 %s161, 1
      %p165 = scmp.eq.s32.totalorder %s22, 1
      %p166 = scmp.ne.s32.totalorder %s161, %s163
      %p167 = scmp.eq.s32.totalorder %s22, 0
      %p168 = por %p166, %p167
      %p169 = scmp.ne.s32.totalorder %s161, %s163
      %p170 = scmp.eq.s32.totalorder %s27, 1
      %p171 = por %p169, %p170
      %p172 = scmp.ne.s32.totalorder %s163, %s164
      %p173 = scmp.eq.s32.totalorder %s27, 0
      %p174 = por %p172, %p173
      %p175 = scmp.ne.s32.totalorder %s163, %s164
      %p176 = scmp.eq.s32.totalorder %s28, 1
      %p177 = por %p175, %p176
      %p179 = scmp.ne.s32.totalorder %s164, %s178
      %p180 = scmp.eq.s32.totalorder %s28, 0
      %p181 = por %p179, %p180
      %s182 = ssub.s32 %s22, %s29
      %p183 = scmp.eq.s32.totalorder %s182, 0
      %s185 = sadd.s32 %s184, 1
      %s186 = scalar_select %p183, %s184, %s185
      %p189 = pneg %p183
      %p190 = scmp.eq.s32.totalorder %s22, 1
      %p191 = por %p189, %p190
      %p192 = scmp.ne.s32.totalorder %s184, %s187
      %p193 = scmp.eq.s32.totalorder %s22, 0
      %p194 = por %p192, %p193
      %p195 = scmp.ne.s32.totalorder %s184, %s187
      %p196 = scmp.eq.s32.totalorder %s27, 1
      %p197 = por %p195, %p196
      %p198 = scmp.ne.s32.totalorder %s187, %s188
      %p199 = scmp.eq.s32.totalorder %s27, 0
      %p200 = por %p198, %p199
      %p201 = scmp.ne.s32.totalorder %s187, %s188
      %p202 = scmp.eq.s32.totalorder %s28, 1
      %p203 = por %p201, %p202
      %p205 = scmp.ne.s32.totalorder %s188, %s204
      %p206 = scmp.eq.s32.totalorder %s28, 0
      %p207 = por %p205, %p206
      %s208 = ssub.s32 %s22, %s29
      %p209 = scmp.eq.s32.totalorder %s208, 0
      %s211 = sadd.s32 %s210, 1
      %s212 = scalar_select %p209, %s210, %s211
      %p215 = pneg %p209
      %p216 = scmp.eq.s32.totalorder %s22, 1
      %p217 = por %p215, %p216
      %p218 = scmp.ne.s32.totalorder %s210, %s213
      %p219 = scmp.eq.s32.totalorder %s22, 0
      %p220 = por %p218, %p219
      %p221 = scmp.ne.s32.totalorder %s210, %s213
      %p222 = scmp.eq.s32.totalorder %s27, 1
      %p223 = por %p221, %p222
      %p224 = scmp.ne.s32.totalorder %s213, %s214
      %p225 = scmp.eq.s32.totalorder %s27, 0
      %p226 = por %p224, %p225
      %p227 = scmp.ne.s32.totalorder %s213, %s214
      %p228 = scmp.eq.s32.totalorder %s28, 1
      %p229 = por %p227, %p228
      %p231 = scmp.ne.s32.totalorder %s214, %s230
      %p232 = scmp.eq.s32.totalorder %s28, 0
      %p233 = por %p231, %p232
      %s234 = ssub.s32 %s22, %s29
      %p235 = scmp.eq.s32.totalorder %s234, 0
      %s237 = sadd.s32 %s236, 1
      %s238 = scalar_select %p235, %s236, %s237
      %p241 = pneg %p235
      %p242 = scmp.eq.s32.totalorder %s22, 1
      %p243 = por %p241, %p242
      %p244 = scmp.ne.s32.totalorder %s236, %s239
      %p245 = scmp.eq.s32.totalorder %s22, 0
      %p246 = por %p244, %p245
      %p247 = scmp.ne.s32.totalorder %s236, %s239
      %p248 = scmp.eq.s32.totalorder %s27, 1
      %p249 = por %p247, %p248
      %p250 = scmp.ne.s32.totalorder %s239, %s240
      %p251 = scmp.eq.s32.totalorder %s27, 0
      %p252 = por %p250, %p251
      %p253 = scmp.ne.s32.totalorder %s239, %s240
      %p254 = scmp.eq.s32.totalorder %s28, 1
      %p255 = por %p253, %p254
      %p257 = scmp.ne.s32.totalorder %s240, %s256
      %p258 = scmp.eq.s32.totalorder %s28, 0
      %p259 = por %p257, %p258
      %p260 = scmp.le.s32.totalorder 1, %s22
      %p261 = scmp.lt.s32.totalorder %s22, 3
      %p262 = pnand %p260, %p261
      %p263 = pneg %p262
      // Predicated region
      $region9: #{tpu_custom_call.1} parent=5 // pred_check
        _
      $region10: #{tpu_custom_call.1} parent=5 // pred_check_branch
        %265 = sbr.rel (%p262) target = $region12
      $region11: #{tpu_custom_call.1} parent=5 // pred_region
        %s266 = ssub.s32 %s22, 1
        // Predicated region
        $region13: #{tpu_custom_call.1} parent=11 // pred_check
          %p267 = pneg %p69
        $region14: #{tpu_custom_call.1} parent=11 // pred_check_branch
          %269 = sbr.rel (%p267) target = $region16
        $region15: #{tpu_custom_call.1} parent=11 // pred_region
          _
        $region16: #{tpu_custom_call.1} parent=11 // pred_fallthru
          _
        // Predicated region
        $region17: #{tpu_custom_call.1} parent=11 // pred_check
          %p270 = pneg %p90
        $region18: #{tpu_custom_call.1} parent=11 // pred_check_branch
          %272 = sbr.rel (%p270) target = $region20
        $region19: #{tpu_custom_call.1} parent=11 // pred_region
          _
        $region20: #{tpu_custom_call.1} parent=11 // pred_fallthru
          _
        // Predicated region
        $region21: #{tpu_custom_call.1} parent=11 // pred_check
          %p273 = pneg %p111
        $region22: #{tpu_custom_call.1} parent=11 // pred_check_branch
          %275 = sbr.rel (%p273) target = $region24
        $region23: #{tpu_custom_call.1} parent=11 // pred_region
          _
        $region24: #{tpu_custom_call.1} parent=11 // pred_fallthru
          _
        // Predicated region
        $region25: #{tpu_custom_call.1} parent=11 // pred_check
          %p276 = pneg %p132
        $region26: #{tpu_custom_call.1} parent=11 // pred_check_branch
          %278 = sbr.rel (%p276) target = $region28
        $region27: #{tpu_custom_call.1} parent=11 // pred_region
          _
        $region28: #{tpu_custom_call.1} parent=11 // pred_fallthru
          _
        // Predicated region
        $region29: #{tpu_custom_call.1} parent=11 // pred_check
          %p279 = pneg %p153
        $region30: #{tpu_custom_call.1} parent=11 // pred_check_branch
          %281 = sbr.rel (%p279) target = $region32
        $region31: #{tpu_custom_call.1} parent=11 // pred_region
          _
        $region32: #{tpu_custom_call.1} parent=11 // pred_fallthru
          _
        // Predicated region
        $region33: #{tpu_custom_call.1} parent=11 // pred_check
          %p282 = pneg %p174
        $region34: #{tpu_custom_call.1} parent=11 // pred_check_branch
          %284 = sbr.rel (%p282) target = $region36
        $region35: #{tpu_custom_call.1} parent=11 // pred_region
          _
        $region36: #{tpu_custom_call.1} parent=11 // pred_fallthru
          _
      $region12: #{tpu_custom_call.1} parent=5 // pred_fallthru
        _
      %p285 = scmp.lt.s32.totalorder %s22, 2
      // Predicated region
      $region37: #{tpu_custom_call.1} parent=5 // pred_check
        %p286 = pneg %p285
      $region38: #{tpu_custom_call.1} parent=5 // pred_check_branch
        %288 = sbr.rel (%p286) target = $region40
      $region39: #{tpu_custom_call.1} parent=5 // pred_region
        // Predicated region
        $region41: #{tpu_custom_call.1} parent=39 // pred_check
          %p289 = pneg %p42
        $region42: #{tpu_custom_call.1} parent=39 // pred_check_branch
          %291 = sbr.rel (%p289) target = $region44
        $region43: #{tpu_custom_call.1} parent=39 // pred_region
          %s292 = smul.u32 32, %s22
          %p293 = scmp.lt.s32.totalorder %s292, 63
          %s294 = scalar_select %p293, %s292, 63
          %s295 = smul.addr %s294, 4
          %s296 = scalar_lea.vmem %s0, %s295
          %s297 = smul.u32 32, %s22
        $region44: #{tpu_custom_call.1} parent=39 // pred_fallthru
          _
      $region40: #{tpu_custom_call.1} parent=5 // pred_fallthru
        _
      %p298 = scmp.le.s32.totalorder 1, %s22
      %p299 = scmp.lt.s32.totalorder %s22, 3
      %p300 = pnand %p298, %p299
      %p301 = pneg %p300
      // Predicated region
      $region45: #{tpu_custom_call.1} parent=5 // pred_check
        _
      $region46: #{tpu_custom_call.1} parent=5 // pred_check_branch
        %303 = sbr.rel (%p300) target = $region48
      $region47: #{tpu_custom_call.1} parent=5 // pred_region
        %s304 = ssub.s32 %s22, 1
        %s305 = smul.u32 32, %s27
        %p306 = scmp.lt.s32.totalorder %s305, 63
        %s307 = scalar_select %p306, %s305, 63
        %s308 = smul.addr %s307, 4
        %s309 = scalar_lea.vmem %s0, %s308
        %p310 = pneg %p48
        %p311 = pneg %p45
        %p312 = pneg %p69
        %p313 = pneg %p66
        %p314 = pneg %p90
        %p315 = pneg %p87
        %p316 = pneg %p111
        %p317 = pneg %p108
        %p318 = pneg %p132
        %p319 = pneg %p129
        %p320 = pneg %p153
        %p321 = pneg %p150
        %p322 = pneg %p174
        %p323 = pneg %p171
        %p324 = pneg %p200
        %p325 = pneg %p197
        %s326 = sand.u32 %s187, 1
        %s327 = scalar_lea.sflag [#allocation3], %s326
        %s328 = sand.u32 %s187, 1
        %s329 = smul.addr %s328, 128
        %s330 = scalar_lea.vmem [#allocation2], %s329
        %p331 = pneg %p226
        %p332 = pneg %p223
        %s333 = sand.u32 %s27, 1
        %s334 = scalar_lea.sflag [#allocation5], %s333
        %s335 = sand.u32 %s213, 1
        %s336 = smul.addr %s335, 128
        %s337 = scalar_lea.vmem [#allocation4], %s336
        %p338 = pneg %p252
        %p339 = pneg %p249
        %s340 = sand.u32 %s27, 1
        %s341 = scalar_lea.sflag [#allocation5], %s340
        %s342 = sand.u32 %s239, 1
        %s343 = smul.addr %s342, 128
        %s344 = scalar_lea.vmem [#allocation6], %s343
        %s345 = smul.u32 32, %s27
        %p346 = scmp.lt.s32.totalorder %s345, 63
        %s347 = scalar_select %p346, %s345, 63
        %s348 = smul.addr %s347, 4
        %s349 = scalar_lea.vmem %s0, %s348
        %s350 = smul.u32 32, %s27
        %s351 = smul.u32 32, %s27
        %s352 = smul.u32 32, %s27
        %s353 = smul.u32 32, %s27
        %v355 = vld [vmem:[%s349] sm:$0xf]
        %v356 = vld [vmem:[%s349 + $0x4] sm:$0xf]
        %v357 = vld [vmem:[%s349 + $0x8] sm:$0xf]
        %v358 = vld [vmem:[%s349 + $0xc] sm:$0xf]
        %v359 = vld [vmem:[%s349 + $0x10] sm:$0xf]
        %v360 = vld [vmem:[%s349 + $0x14] sm:$0xf]
        %v361 = vld [vmem:[%s349 + $0x18] sm:$0xf]
        %v362 = vld [vmem:[%s349 + $0x1c] sm:$0xf]
        %v363 = vld [vmem:[%s349 + $0x20] sm:$0xf]
        %v364 = vld [vmem:[%s349 + $0x24] sm:$0xf]
        %v365 = vld [vmem:[%s349 + $0x28] sm:$0xf]
        %v366 = vld [vmem:[%s349 + $0x2c] sm:$0xf]
        %v367 = vld [vmem:[%s349 + $0x30] sm:$0xf]
        %v368 = vld [vmem:[%s349 + $0x34] sm:$0xf]
        %v369 = vld [vmem:[%s349 + $0x38] sm:$0xf]
        %v370 = vld [vmem:[%s349 + $0x3c] sm:$0xf]
        %v371 = vld [vmem:[%s349 + $0x40] sm:$0xf]
        %v372 = vld [vmem:[%s349 + $0x44] sm:$0xf]
        %v373 = vld [vmem:[%s349 + $0x48] sm:$0xf]
        %v374 = vld [vmem:[%s349 + $0x4c] sm:$0xf]
        %v375 = vld [vmem:[%s349 + $0x50] sm:$0xf]
        %v376 = vld [vmem:[%s349 + $0x54] sm:$0xf]
        %v377 = vld [vmem:[%s349 + $0x58] sm:$0xf]
        %v378 = vld [vmem:[%s349 + $0x5c] sm:$0xf]
        %v379 = vld [vmem:[%s349 + $0x60] sm:$0xf]
        %v380 = vld [vmem:[%s349 + $0x64] sm:$0xf]
        %v381 = vld [vmem:[%s349 + $0x68] sm:$0xf]
        %v382 = vld [vmem:[%s349 + $0x6c] sm:$0xf]
        %v383 = vld [vmem:[%s349 + $0x70] sm:$0xf]
        %v384 = vld [vmem:[%s349 + $0x74] sm:$0xf]
        %v385 = vld [vmem:[%s349 + $0x78] sm:$0xf]
        %v386 = vld [vmem:[%s349 + $0x7c] sm:$0xf]
        %v387 = vld [vmem:[%s1] sm:$0xff]
        %v388 = vld [vmem:[%s1 + $0x8] sm:$0xff]
        %v389 = vld [vmem:[%s1 + $0x10] sm:$0xff]
        %v390 = vld [vmem:[%s1 + $0x18] sm:$0x33]
        %v423 = vunpack.c.l.b16 %v355
        %v424 = vunpack.c.l.b16 %v356
        %v425 = vunpack.c.l.b16 %v357
        %v426 = vunpack.c.l.b16 %v358
        %v427 = vunpack.c.l.b16 %v359
        %v428 = vunpack.c.l.b16 %v360
        %v429 = vunpack.c.l.b16 %v361
        %v430 = vunpack.c.l.b16 %v362
        %v431 = vunpack.c.l.b16 %v363
        %v432 = vunpack.c.l.b16 %v364
        %v433 = vunpack.c.l.b16 %v365
        %v434 = vunpack.c.l.b16 %v366
        %v435 = vunpack.c.l.b16 %v367
        %v436 = vunpack.c.l.b16 %v368
        %v437 = vunpack.c.l.b16 %v369
        %v438 = vunpack.c.l.b16 %v370
        %v439 = vunpack.c.l.b16 %v371
        %v440 = vunpack.c.l.b16 %v372
        %v441 = vunpack.c.l.b16 %v373
        %v442 = vunpack.c.l.b16 %v374
        %v443 = vunpack.c.l.b16 %v375
        %v444 = vunpack.c.l.b16 %v376
        %v445 = vunpack.c.l.b16 %v377
        %v446 = vunpack.c.l.b16 %v378
        %v447 = vunpack.c.l.b16 %v379
        %v448 = vunpack.c.l.b16 %v380
        %v449 = vunpack.c.l.b16 %v381
        %v450 = vunpack.c.l.b16 %v382
        %v451 = vunpack.c.l.b16 %v383
        %v452 = vunpack.c.l.b16 %v384
        %v453 = vunpack.c.l.b16 %v385
        %v454 = vunpack.c.l.b16 %v386
        %v455 = vpack.c.b16 %v424, %v423
        %v456 = vpack.c.b16 %v426, %v425
        %v457 = vpack.c.b16 %v428, %v427
        %v458 = vpack.c.b16 %v430, %v429
        %v459 = vpack.c.b16 %v432, %v431
        %v460 = vpack.c.b16 %v434, %v433
        %v461 = vpack.c.b16 %v436, %v435
        %v462 = vpack.c.b16 %v438, %v437
        %v463 = vpack.c.b16 %v440, %v439
        %v464 = vpack.c.b16 %v442, %v441
        %v465 = vpack.c.b16 %v444, %v443
        %v466 = vpack.c.b16 %v446, %v445
        %v467 = vpack.c.b16 %v448, %v447
        %v468 = vpack.c.b16 %v450, %v449
        %v469 = vpack.c.b16 %v452, %v451
        %v470 = vpack.c.b16 %v454, %v453
        %v475 = vunpack.c.l.b16 %v387
        %v476 = vunpack.c.h.b16 %v387
        %v477 = vunpack.c.l.b16 %v388
        %v478 = vunpack.c.h.b16 %v388
        %v479 = vunpack.c.l.b16 %v389
        %v480 = vunpack.c.h.b16 %v389
        %v481 = vunpack.c.l.b16 %v390
        %v482 = vunpack.c.h.b16 %v390
        %v483 = vpack.c.b16 %v477, %v475
        %v484 = vpack.c.b16 %v478, %v476
        %v485 = vpack.c.b16 %v481, %v479
        %v486 = vpack.c.b16 %v482, %v480
        %vm489 = vcmask 220160
        %v491 = vsel %vm489, %v455, 0
        %v494 = vsel %vm489, %v456, 0
        %v497 = vsel %vm489, %v457, 0
        %v500 = vsel %vm489, %v458, 0
        %v503 = vsel %vm489, %v459, 0
        %v506 = vsel %vm489, %v460, 0
        %v509 = vsel %vm489, %v461, 0
        %v512 = vsel %vm489, %v462, 0
        %v515 = vsel %vm489, %v463, 0
        %v518 = vsel %vm489, %v464, 0
        %v521 = vsel %vm489, %v465, 0
        %v524 = vsel %vm489, %v466, 0
        %v527 = vsel %vm489, %v467, 0
        %v530 = vsel %vm489, %v468, 0
        %v533 = vsel %vm489, %v469, 0
        %v536 = vsel %vm489, %v470, 0
        %vm538 = vcmask 1044480
        %vm539 = vcmask 1045504
        %v540 = vsel %vm538, 4294967295, 65535
        %v541 = vsel %vm539, %v540, 0
        %v543 = vand.u32 %v485, %v541
        %v546 = vand.u32 %v486, %v541
        %548 = vmatprep.subr.bf16.mxu0 0
        %549 = vmatpush1.bf16.msra.mxu0 0
        %550 = vmatprep.subr.bf16.mxu0 0
        %551 = vmatpush1.bf16.msra.mxu0 0
        %552 = vmatprep.subr.bf16.mxu0 0
        %553 = vmatpush1.bf16.msra.mxu0 0
        %554 = vmatprep.subr.bf16.mxu0 0
        %555 = vmatpush1.bf16.msra.mxu0 0
        %556 = vmatprep.subr.bf16.mxu0 0
        %557 = vmatpush1.bf16.msra.mxu0 0
        %558 = vmatprep.subr.bf16.mxu0 0
        %559 = vmatpush1.bf16.msra.mxu0 0
        %560 = vmatprep.subr.bf16.mxu0 %v546
        %561 = vmatpush1.bf16.msra.mxu0 %v543
        %562 = vmatprep.subr.bf16.mxu0 %v484
        %563 = vmatpush1.bf16.msra.mxu0 %v483
        %564 = vmatprep.subr.bf16.mxu0 0
        %565 = vmatpush2.bf16.msra.mxu0 0
        %566 = vmatprep.subr.bf16.mxu0 0
        %567 = vmatpush2.bf16.msra.mxu0 0
        %568 = vmatprep.subr.bf16.mxu0 0
        %569 = vmatpush2.bf16.msra.mxu0 0
        %570 = vmatprep.subr.bf16.mxu0 0
        %571 = vmatpush2.bf16.msra.mxu0 0
        %572 = vmatprep.subr.bf16.mxu0 0
        %573 = vmatpush2.bf16.msra.mxu0 0
        %574 = vmatprep.subr.bf16.mxu0 0
        %575 = vmatpush2.bf16.msra.mxu0 0
        %576 = vmatprep.subr.bf16.mxu0 0
        %577 = vmatpush2.bf16.msra.mxu0 0
        %578 = vmatprep.subr.bf16.mxu0 0
        %579 = vmatpush2.bf16.msra.mxu0 0
        %580 = vmatprep.mubr.bf16.mxu0 0
        %581 = vmatmul.mubr.bf16.gmra.mxu0 %v491
        %v582 = vpop.f32.mrf.mxu0
        %v583 = vadd.f32 0.0, %v582
        %v584 = vpop.f32.mrf.mxu0
        %v585 = vadd.f32 0.0, %v584
        %v586 = vpop.f32.mrf.mxu0
        %v587 = vadd.f32 0.0, %v586
        %v588 = vpop.f32.mrf.mxu0
        %v589 = vadd.f32 0.0, %v588
        %590 = vmatprep.mubr.bf16.mxu0 0
        %591 = vmatmul.mubr.bf16.gmra.mxu0 %v494
        %v592 = vpop.f32.mrf.mxu0
        %v593 = vadd.f32 0.0, %v592
        %v594 = vpop.f32.mrf.mxu0
        %v595 = vadd.f32 0.0, %v594
        %v596 = vpop.f32.mrf.mxu0
        %v597 = vadd.f32 0.0, %v596
        %v598 = vpop.f32.mrf.mxu0
        %v599 = vadd.f32 0.0, %v598
        %600 = vmatprep.mubr.bf16.mxu0 0
        %601 = vmatmul.mubr.bf16.gmra.mxu0 %v497
        %v602 = vpop.f32.mrf.mxu0
        %v603 = vadd.f32 0.0, %v602
        %v604 = vpop.f32.mrf.mxu0
        %v605 = vadd.f32 0.0, %v604
        %v606 = vpop.f32.mrf.mxu0
        %v607 = vadd.f32 0.0, %v606
        %v608 = vpop.f32.mrf.mxu0
        %v609 = vadd.f32 0.0, %v608
        %610 = vmatprep.mubr.bf16.mxu0 0
        %611 = vmatmul.mubr.bf16.gmra.mxu0 %v500
        %v612 = vpop.f32.mrf.mxu0
        %v613 = vadd.f32 0.0, %v612
        %v614 = vpop.f32.mrf.mxu0
        %v615 = vadd.f32 0.0, %v614
        %v616 = vpop.f32.mrf.mxu0
        %v617 = vadd.f32 0.0, %v616
        %v618 = vpop.f32.mrf.mxu0
        %v619 = vadd.f32 0.0, %v618
        %620 = vmatprep.mubr.bf16.mxu0 0
        %621 = vmatmul.mubr.bf16.gmra.mxu0 %v503
        %v622 = vpop.f32.mrf.mxu0
        %v623 = vadd.f32 0.0, %v622
        %v624 = vpop.f32.mrf.mxu0
        %v625 = vadd.f32 0.0, %v624
        %v626 = vpop.f32.mrf.mxu0
        %v627 = vadd.f32 0.0, %v626
        %v628 = vpop.f32.mrf.mxu0
        %v629 = vadd.f32 0.0, %v628
        %630 = vmatprep.mubr.bf16.mxu0 0
        %631 = vmatmul.mubr.bf16.gmra.mxu0 %v506
        %v632 = vpop.f32.mrf.mxu0
        %v633 = vadd.f32 0.0, %v632
        %v634 = vpop.f32.mrf.mxu0
        %v635 = vadd.f32 0.0, %v634
        %v636 = vpop.f32.mrf.mxu0
        %v637 = vadd.f32 0.0, %v636
        %v638 = vpop.f32.mrf.mxu0
        %v639 = vadd.f32 0.0, %v638
        %640 = vmatprep.mubr.bf16.mxu0 0
        %641 = vmatmul.mubr.bf16.gmra.mxu0 %v509
        %v642 = vpop.f32.mrf.mxu0
        %v643 = vadd.f32 0.0, %v642
        %v644 = vpop.f32.mrf.mxu0
        %v645 = vadd.f32 0.0, %v644
        %v646 = vpop.f32.mrf.mxu0
        %v647 = vadd.f32 0.0, %v646
        %v648 = vpop.f32.mrf.mxu0
        %v649 = vadd.f32 0.0, %v648
        %650 = vmatprep.mubr.bf16.mxu0 0
        %651 = vmatmul.mubr.bf16.gmra.mxu0 %v512
        %v652 = vpop.f32.mrf.mxu0
        %v653 = vadd.f32 0.0, %v652
        %v654 = vpop.f32.mrf.mxu0
        %v655 = vadd.f32 0.0, %v654
        %v656 = vpop.f32.mrf.mxu0
        %v657 = vadd.f32 0.0, %v656
        %v658 = vpop.f32.mrf.mxu0
        %v659 = vadd.f32 0.0, %v658
        %660 = vmatprep.mubr.bf16.mxu0 0
        %661 = vmatmul.mubr.bf16.gmra.mxu0 %v515
        %v662 = vpop.f32.mrf.mxu0
        %v663 = vadd.f32 0.0, %v662
        %v664 = vpop.f32.mrf.mxu0
        %v665 = vadd.f32 0.0, %v664
        %v666 = vpop.f32.mrf.mxu0
        %v667 = vadd.f32 0.0, %v666
        %v668 = vpop.f32.mrf.mxu0
        %v669 = vadd.f32 0.0, %v668
        %670 = vmatprep.mubr.bf16.mxu0 0
        %671 = vmatmul.mubr.bf16.gmra.mxu0 %v518
        %v672 = vpop.f32.mrf.mxu0
        %v673 = vadd.f32 0.0, %v672
        %v674 = vpop.f32.mrf.mxu0
        %v675 = vadd.f32 0.0, %v674
        %v676 = vpop.f32.mrf.mxu0
        %v677 = vadd.f32 0.0, %v676
        %v678 = vpop.f32.mrf.mxu0
        %v679 = vadd.f32 0.0, %v678
        %680 = vmatprep.mubr.bf16.mxu0 0
        %681 = vmatmul.mubr.bf16.gmra.mxu0 %v521
        %v682 = vpop.f32.mrf.mxu0
        %v683 = vadd.f32 0.0, %v682
        %v684 = vpop.f32.mrf.mxu0
        %v685 = vadd.f32 0.0, %v684
        %v686 = vpop.f32.mrf.mxu0
        %v687 = vadd.f32 0.0, %v686
        %v688 = vpop.f32.mrf.mxu0
        %v689 = vadd.f32 0.0, %v688
        %690 = vmatprep.mubr.bf16.mxu0 0
        %691 = vmatmul.mubr.bf16.gmra.mxu0 %v524
        %v692 = vpop.f32.mrf.mxu0
        %v693 = vadd.f32 0.0, %v692
        %v694 = vpop.f32.mrf.mxu0
        %v695 = vadd.f32 0.0, %v694
        %v696 = vpop.f32.mrf.mxu0
        %v697 = vadd.f32 0.0, %v696
        %v698 = vpop.f32.mrf.mxu0
        %v699 = vadd.f32 0.0, %v698
        %700 = vmatprep.mubr.bf16.mxu0 0
        %701 = vmatmul.mubr.bf16.gmra.mxu0 %v527
        %v702 = vpop.f32.mrf.mxu0
        %v703 = vadd.f32 0.0, %v702
        %v704 = vpop.f32.mrf.mxu0
        %v705 = vadd.f32 0.0, %v704
        %v706 = vpop.f32.mrf.mxu0
        %v707 = vadd.f32 0.0, %v706
        %v708 = vpop.f32.mrf.mxu0
        %v709 = vadd.f32 0.0, %v708
        %710 = vmatprep.mubr.bf16.mxu0 0
        %711 = vmatmul.mubr.bf16.gmra.mxu0 %v530
        %v712 = vpop.f32.mrf.mxu0
        %v713 = vadd.f32 0.0, %v712
        %v714 = vpop.f32.mrf.mxu0
        %v715 = vadd.f32 0.0, %v714
        %v716 = vpop.f32.mrf.mxu0
        %v717 = vadd.f32 0.0, %v716
        %v718 = vpop.f32.mrf.mxu0
        %v719 = vadd.f32 0.0, %v718
        %720 = vmatprep.mubr.bf16.mxu0 0
        %721 = vmatmul.mubr.bf16.gmra.mxu0 %v533
        %v722 = vpop.f32.mrf.mxu0
        %v723 = vadd.f32 0.0, %v722
        %v724 = vpop.f32.mrf.mxu0
        %v725 = vadd.f32 0.0, %v724
        %v726 = vpop.f32.mrf.mxu0
        %v727 = vadd.f32 0.0, %v726
        %v728 = vpop.f32.mrf.mxu0
        %v729 = vadd.f32 0.0, %v728
        %730 = vmatprep.mubr.bf16.mxu0 0
        %731 = vmatmul.mubr.bf16.gmra.mxu0 %v536
        %v732 = vpop.f32.mrf.mxu0
        %v733 = vadd.f32 0.0, %v732
        %v734 = vpop.f32.mrf.mxu0
        %v735 = vadd.f32 0.0, %v734
        %v736 = vpop.f32.mrf.mxu0
        %v737 = vadd.f32 0.0, %v736
        %v738 = vpop.f32.mrf.mxu0
        %v739 = vadd.f32 0.0, %v738
        %740 = vdwg.mxu0
        %v741 = vld [vmem:[%s2] sm:$0x3]
        %v743 = vlaneseq
        %v744 = vshrl.u32 %v743, 7
        %v745 = vsub.s32 0, %v744
        %v746 = vrot.slane %v741, %v745
        %v747 = vlaneseq
        %v748 = vshrl.u32 %v747, 7
        %v749 = vsub.s32 1, %v748
        %v750 = vrot.slane %v741, %v749
        %v753 = vmul.f32 %v583, %v746
        %v754 = vmul.f32 %v585, %v750
        %v755 = vmul.f32 %v587, %v746
        %v756 = vmul.f32 %v589, %v750
        %v757 = vmul.f32 %v593, %v746
        %v758 = vmul.f32 %v595, %v750
        %v759 = vmul.f32 %v597, %v746
        %v760 = vmul.f32 %v599, %v750
        %v761 = vmul.f32 %v603, %v746
        %v762 = vmul.f32 %v605, %v750
        %v763 = vmul.f32 %v607, %v746
        %v764 = vmul.f32 %v609, %v750
        %v765 = vmul.f32 %v613, %v746
        %v766 = vmul.f32 %v615, %v750
        %v767 = vmul.f32 %v617, %v746
        %v768 = vmul.f32 %v619, %v750
        %v769 = vmul.f32 %v623, %v746
        %v770 = vmul.f32 %v625, %v750
        %v771 = vmul.f32 %v627, %v746
        %v772 = vmul.f32 %v629, %v750
        %v773 = vmul.f32 %v633, %v746
        %v774 = vmul.f32 %v635, %v750
        %v775 = vmul.f32 %v637, %v746
        %v776 = vmul.f32 %v639, %v750
        %v777 = vmul.f32 %v643, %v746
        %v778 = vmul.f32 %v645, %v750
        %v779 = vmul.f32 %v647, %v746
        %v780 = vmul.f32 %v649, %v750
        %v781 = vmul.f32 %v653, %v746
        %v782 = vmul.f32 %v655, %v750
        %v783 = vmul.f32 %v657, %v746
        %v784 = vmul.f32 %v659, %v750
        %v785 = vmul.f32 %v663, %v746
        %v786 = vmul.f32 %v665, %v750
        %v787 = vmul.f32 %v667, %v746
        %v788 = vmul.f32 %v669, %v750
        %v789 = vmul.f32 %v673, %v746
        %v790 = vmul.f32 %v675, %v750
        %v791 = vmul.f32 %v677, %v746
        %v792 = vmul.f32 %v679, %v750
        %v793 = vmul.f32 %v683, %v746
        %v794 = vmul.f32 %v685, %v750
        %v795 = vmul.f32 %v687, %v746
        %v796 = vmul.f32 %v689, %v750
        %v797 = vmul.f32 %v693, %v746
        %v798 = vmul.f32 %v695, %v750
        %v799 = vmul.f32 %v697, %v746
        %v800 = vmul.f32 %v699, %v750
        %v801 = vmul.f32 %v703, %v746
        %v802 = vmul.f32 %v705, %v750
        %v803 = vmul.f32 %v707, %v746
        %v804 = vmul.f32 %v709, %v750
        %v805 = vmul.f32 %v713, %v746
        %v806 = vmul.f32 %v715, %v750
        %v807 = vmul.f32 %v717, %v746
        %v808 = vmul.f32 %v719, %v750
        %v809 = vmul.f32 %v723, %v746
        %v810 = vmul.f32 %v725, %v750
        %v811 = vmul.f32 %v727, %v746
        %v812 = vmul.f32 %v729, %v750
        %v813 = vmul.f32 %v733, %v746
        %v814 = vmul.f32 %v735, %v750
        %v815 = vmul.f32 %v737, %v746
        %v816 = vmul.f32 %v739, %v750
        %v817 = vld [vmem:[%s3] sm:$0x3]
        %v819 = vlaneseq
        %v820 = vshrl.u32 %v819, 7
        %v821 = vsub.s32 0, %v820
        %v822 = vrot.slane %v817, %v821
        %v823 = vlaneseq
        %v824 = vshrl.u32 %v823, 7
        %v825 = vsub.s32 1, %v824
        %v826 = vrot.slane %v817, %v825
        %v829 = vadd.f32 %v753, %v822
        %v830 = vadd.f32 %v754, %v826
        %v831 = vadd.f32 %v755, %v822
        %v832 = vadd.f32 %v756, %v826
        %v833 = vadd.f32 %v757, %v822
        %v834 = vadd.f32 %v758, %v826
        %v835 = vadd.f32 %v759, %v822
        %v836 = vadd.f32 %v760, %v826
        %v837 = vadd.f32 %v761, %v822
        %v838 = vadd.f32 %v762, %v826
        %v839 = vadd.f32 %v763, %v822
        %v840 = vadd.f32 %v764, %v826
        %v841 = vadd.f32 %v765, %v822
        %v842 = vadd.f32 %v766, %v826
        %v843 = vadd.f32 %v767, %v822
        %v844 = vadd.f32 %v768, %v826
        %v845 = vadd.f32 %v769, %v822
        %v846 = vadd.f32 %v770, %v826
        %v847 = vadd.f32 %v771, %v822
        %v848 = vadd.f32 %v772, %v826
        %v849 = vadd.f32 %v773, %v822
        %v850 = vadd.f32 %v774, %v826
        %v851 = vadd.f32 %v775, %v822
        %v852 = vadd.f32 %v776, %v826
        %v853 = vadd.f32 %v777, %v822
        %v854 = vadd.f32 %v778, %v826
        %v855 = vadd.f32 %v779, %v822
        %v856 = vadd.f32 %v780, %v826
        %v857 = vadd.f32 %v781, %v822
        %v858 = vadd.f32 %v782, %v826
        %v859 = vadd.f32 %v783, %v822
        %v860 = vadd.f32 %v784, %v826
        %v861 = vadd.f32 %v785, %v822
        %v862 = vadd.f32 %v786, %v826
        %v863 = vadd.f32 %v787, %v822
        %v864 = vadd.f32 %v788, %v826
        %v865 = vadd.f32 %v789, %v822
        %v866 = vadd.f32 %v790, %v826
        %v867 = vadd.f32 %v791, %v822
        %v868 = vadd.f32 %v792, %v826
        %v869 = vadd.f32 %v793, %v822
        %v870 = vadd.f32 %v794, %v826
        %v871 = vadd.f32 %v795, %v822
        %v872 = vadd.f32 %v796, %v826
        %v873 = vadd.f32 %v797, %v822
        %v874 = vadd.f32 %v798, %v826
        %v875 = vadd.f32 %v799, %v822
        %v876 = vadd.f32 %v800, %v826
        %v877 = vadd.f32 %v801, %v822
        %v878 = vadd.f32 %v802, %v826
        %v879 = vadd.f32 %v803, %v822
        %v880 = vadd.f32 %v804, %v826
        %v881 = vadd.f32 %v805, %v822
        %v882 = vadd.f32 %v806, %v826
        %v883 = vadd.f32 %v807, %v822
        %v884 = vadd.f32 %v808, %v826
        %v885 = vadd.f32 %v809, %v822
        %v886 = vadd.f32 %v810, %v826
        %v887 = vadd.f32 %v811, %v822
        %v888 = vadd.f32 %v812, %v826
        %v889 = vadd.f32 %v813, %v822
        %v890 = vadd.f32 %v814, %v826
        %v891 = vadd.f32 %v815, %v822
        %v892 = vadd.f32 %v816, %v826
        %v893 = vmax.f32 %v829, 0.0
        %v894 = vmax.f32 %v830, 0.0
        %v895 = vmax.f32 %v831, 0.0
        %v896 = vmax.f32 %v832, 0.0
        %v897 = vmax.f32 %v833, 0.0
        %v898 = vmax.f32 %v834, 0.0
        %v899 = vmax.f32 %v835, 0.0
        %v900 = vmax.f32 %v836, 0.0
        %v901 = vmax.f32 %v837, 0.0
        %v902 = vmax.f32 %v838, 0.0
        %v903 = vmax.f32 %v839, 0.0
        %v904 = vmax.f32 %v840, 0.0
        %v905 = vmax.f32 %v841, 0.0
        %v906 = vmax.f32 %v842, 0.0
        %v907 = vmax.f32 %v843, 0.0
        %v908 = vmax.f32 %v844, 0.0
        %v909 = vmax.f32 %v845, 0.0
        %v910 = vmax.f32 %v846, 0.0
        %v911 = vmax.f32 %v847, 0.0
        %v912 = vmax.f32 %v848, 0.0
        %v913 = vmax.f32 %v849, 0.0
        %v914 = vmax.f32 %v850, 0.0
        %v915 = vmax.f32 %v851, 0.0
        %v916 = vmax.f32 %v852, 0.0
        %v917 = vmax.f32 %v853, 0.0
        %v918 = vmax.f32 %v854, 0.0
        %v919 = vmax.f32 %v855, 0.0
        %v920 = vmax.f32 %v856, 0.0
        %v921 = vmax.f32 %v857, 0.0
        %v922 = vmax.f32 %v858, 0.0
        %v923 = vmax.f32 %v859, 0.0
        %v924 = vmax.f32 %v860, 0.0
        %v925 = vmax.f32 %v861, 0.0
        %v926 = vmax.f32 %v862, 0.0
        %v927 = vmax.f32 %v863, 0.0
        %v928 = vmax.f32 %v864, 0.0
        %v929 = vmax.f32 %v865, 0.0
        %v930 = vmax.f32 %v866, 0.0
        %v931 = vmax.f32 %v867, 0.0
        %v932 = vmax.f32 %v868, 0.0
        %v933 = vmax.f32 %v869, 0.0
        %v934 = vmax.f32 %v870, 0.0
        %v935 = vmax.f32 %v871, 0.0
        %v936 = vmax.f32 %v872, 0.0
        %v937 = vmax.f32 %v873, 0.0
        %v938 = vmax.f32 %v874, 0.0
        %v939 = vmax.f32 %v875, 0.0
        %v940 = vmax.f32 %v876, 0.0
        %v941 = vmax.f32 %v877, 0.0
        %v942 = vmax.f32 %v878, 0.0
        %v943 = vmax.f32 %v879, 0.0
        %v944 = vmax.f32 %v880, 0.0
        %v945 = vmax.f32 %v881, 0.0
        %v946 = vmax.f32 %v882, 0.0
        %v947 = vmax.f32 %v883, 0.0
        %v948 = vmax.f32 %v884, 0.0
        %v949 = vmax.f32 %v885, 0.0
        %v950 = vmax.f32 %v886, 0.0
        %v951 = vmax.f32 %v887, 0.0
        %v952 = vmax.f32 %v888, 0.0
        %v953 = vmax.f32 %v889, 0.0
        %v954 = vmax.f32 %v890, 0.0
        %v955 = vmax.f32 %v891, 0.0
        %v956 = vmax.f32 %v892, 0.0
        %v957 = vpack.c.bf16 %v895, %v893
        %v958 = vpack.c.bf16 %v899, %v897
        %v959 = vpack.c.bf16 %v903, %v901
        %v960 = vpack.c.bf16 %v907, %v905
        %v961 = vpack.c.bf16 %v911, %v909
        %v962 = vpack.c.bf16 %v915, %v913
        %v963 = vpack.c.bf16 %v919, %v917
        %v964 = vpack.c.bf16 %v923, %v921
        %v965 = vpack.c.bf16 %v927, %v925
        %v966 = vpack.c.bf16 %v931, %v929
        %v967 = vpack.c.bf16 %v935, %v933
        %v968 = vpack.c.bf16 %v939, %v937
        %v969 = vpack.c.bf16 %v943, %v941
        %v970 = vpack.c.bf16 %v947, %v945
        %v971 = vpack.c.bf16 %v951, %v949
        %v972 = vpack.c.bf16 %v955, %v953
        %v989 = vunpack.c.l.b16 %v957
        %v990 = vunpack.c.h.b16 %v957
        %v991 = vunpack.c.l.b16 %v958
        %v992 = vunpack.c.h.b16 %v958
        %v993 = vunpack.c.l.b16 %v959
        %v994 = vunpack.c.h.b16 %v959
        %v995 = vunpack.c.l.b16 %v960
        %v996 = vunpack.c.h.b16 %v960
        %v997 = vunpack.c.l.b16 %v961
        %v998 = vunpack.c.h.b16 %v961
        %v999 = vunpack.c.l.b16 %v962
        %v1000 = vunpack.c.h.b16 %v962
        %v1001 = vunpack.c.l.b16 %v963
        %v1002 = vunpack.c.h.b16 %v963
        %v1003 = vunpack.c.l.b16 %v964
        %v1004 = vunpack.c.h.b16 %v964
        %v1005 = vunpack.c.l.b16 %v965
        %v1006 = vunpack.c.h.b16 %v965
        %v1007 = vunpack.c.l.b16 %v966
        %v1008 = vunpack.c.h.b16 %v966
        %v1009 = vunpack.c.l.b16 %v967
        %v1010 = vunpack.c.h.b16 %v967
        %v1011 = vunpack.c.l.b16 %v968
        %v1012 = vunpack.c.h.b16 %v968
        %v1013 = vunpack.c.l.b16 %v969
        %v1014 = vunpack.c.h.b16 %v969
        %v1015 = vunpack.c.l.b16 %v970
        %v1016 = vunpack.c.h.b16 %v970
        %v1017 = vunpack.c.l.b16 %v971
        %v1018 = vunpack.c.h.b16 %v971
        %v1019 = vunpack.c.l.b16 %v972
        %v1020 = vunpack.c.h.b16 %v972
        %v1021 = vpack.c.b16 %v989, %v989
        %v1022 = vpack.c.b16 %v990, %v990
        %v1023 = vpack.c.b16 %v991, %v991
        %v1024 = vpack.c.b16 %v992, %v992
        %v1025 = vpack.c.b16 %v993, %v993
        %v1026 = vpack.c.b16 %v994, %v994
        %v1027 = vpack.c.b16 %v995, %v995
        %v1028 = vpack.c.b16 %v996, %v996
        %v1029 = vpack.c.b16 %v997, %v997
        %v1030 = vpack.c.b16 %v998, %v998
        %v1031 = vpack.c.b16 %v999, %v999
        %v1032 = vpack.c.b16 %v1000, %v1000
        %v1033 = vpack.c.b16 %v1001, %v1001
        %v1034 = vpack.c.b16 %v1002, %v1002
        %v1035 = vpack.c.b16 %v1003, %v1003
        %v1036 = vpack.c.b16 %v1004, %v1004
        %v1037 = vpack.c.b16 %v1005, %v1005
        %v1038 = vpack.c.b16 %v1006, %v1006
        %v1039 = vpack.c.b16 %v1007, %v1007
        %v1040 = vpack.c.b16 %v1008, %v1008
        %v1041 = vpack.c.b16 %v1009, %v1009
        %v1042 = vpack.c.b16 %v1010, %v1010
        %v1043 = vpack.c.b16 %v1011, %v1011
        %v1044 = vpack.c.b16 %v1012, %v1012
        %v1045 = vpack.c.b16 %v1013, %v1013
        %v1046 = vpack.c.b16 %v1014, %v1014
        %v1047 = vpack.c.b16 %v1015, %v1015
        %v1048 = vpack.c.b16 %v1016, %v1016
        %v1049 = vpack.c.b16 %v1017, %v1017
        %v1050 = vpack.c.b16 %v1018, %v1018
        %v1051 = vpack.c.b16 %v1019, %v1019
        %v1052 = vpack.c.b16 %v1020, %v1020
        %1085 = vst [vmem:[%s330] sm:$0xf] %v1021
        %1086 = vst [vmem:[%s330 + $0x4] sm:$0xf] %v1022
        %1087 = vst [vmem:[%s330 + $0x8] sm:$0xf] %v1023
        %1088 = vst [vmem:[%s330 + $0xc] sm:$0xf] %v1024
        %1089 = vst [vmem:[%s330 + $0x10] sm:$0xf] %v1025
        %1090 = vst [vmem:[%s330 + $0x14] sm:$0xf] %v1026
        %1091 = vst [vmem:[%s330 + $0x18] sm:$0xf] %v1027
        %1092 = vst [vmem:[%s330 + $0x1c] sm:$0xf] %v1028
        %1093 = vst [vmem:[%s330 + $0x20] sm:$0xf] %v1029
        %1094 = vst [vmem:[%s330 + $0x24] sm:$0xf] %v1030
        %1095 = vst [vmem:[%s330 + $0x28] sm:$0xf] %v1031
        %1096 = vst [vmem:[%s330 + $0x2c] sm:$0xf] %v1032
        %1097 = vst [vmem:[%s330 + $0x30] sm:$0xf] %v1033
        %1098 = vst [vmem:[%s330 + $0x34] sm:$0xf] %v1034
        %1099 = vst [vmem:[%s330 + $0x38] sm:$0xf] %v1035
        %1100 = vst [vmem:[%s330 + $0x3c] sm:$0xf] %v1036
        %1101 = vst [vmem:[%s330 + $0x40] sm:$0xf] %v1037
        %1102 = vst [vmem:[%s330 + $0x44] sm:$0xf] %v1038
        %1103 = vst [vmem:[%s330 + $0x48] sm:$0xf] %v1039
        %1104 = vst [vmem:[%s330 + $0x4c] sm:$0xf] %v1040
        %1105 = vst [vmem:[%s330 + $0x50] sm:$0xf] %v1041
        %1106 = vst [vmem:[%s330 + $0x54] sm:$0xf] %v1042
        %1107 = vst [vmem:[%s330 + $0x58] sm:$0xf] %v1043
        %1108 = vst [vmem:[%s330 + $0x5c] sm:$0xf] %v1044
        %1109 = vst [vmem:[%s330 + $0x60] sm:$0xf] %v1045
        %1110 = vst [vmem:[%s330 + $0x64] sm:$0xf] %v1046
        %1111 = vst [vmem:[%s330 + $0x68] sm:$0xf] %v1047
        %1112 = vst [vmem:[%s330 + $0x6c] sm:$0xf] %v1048
        %1113 = vst [vmem:[%s330 + $0x70] sm:$0xf] %v1049
        %1114 = vst [vmem:[%s330 + $0x74] sm:$0xf] %v1050
        %1115 = vst [vmem:[%s330 + $0x78] sm:$0xf] %v1051
        %1116 = vst [vmem:[%s330 + $0x7c] sm:$0xf] %v1052
        %v1117 = vpack.c.bf16 %v896, %v894
        %v1118 = vpack.c.bf16 %v900, %v898
        %v1119 = vpack.c.bf16 %v904, %v902
        %v1120 = vpack.c.bf16 %v908, %v906
        %v1121 = vpack.c.bf16 %v912, %v910
        %v1122 = vpack.c.bf16 %v916, %v914
        %v1123 = vpack.c.bf16 %v920, %v918
        %v1124 = vpack.c.bf16 %v924, %v922
        %v1125 = vpack.c.bf16 %v928, %v926
        %v1126 = vpack.c.bf16 %v932, %v930
        %v1127 = vpack.c.bf16 %v936, %v934
        %v1128 = vpack.c.bf16 %v940, %v938
        %v1129 = vpack.c.bf16 %v944, %v942
        %v1130 = vpack.c.bf16 %v948, %v946
        %v1131 = vpack.c.bf16 %v952, %v950
        %v1132 = vpack.c.bf16 %v956, %v954
        %v1149 = vunpack.c.l.b16 %v1117
        %v1150 = vunpack.c.h.b16 %v1117
        %v1151 = vunpack.c.l.b16 %v1118
        %v1152 = vunpack.c.h.b16 %v1118
        %v1153 = vunpack.c.l.b16 %v1119
        %v1154 = vunpack.c.h.b16 %v1119
        %v1155 = vunpack.c.l.b16 %v1120
        %v1156 = vunpack.c.h.b16 %v1120
        %v1157 = vunpack.c.l.b16 %v1121
        %v1158 = vunpack.c.h.b16 %v1121
        %v1159 = vunpack.c.l.b16 %v1122
        %v1160 = vunpack.c.h.b16 %v1122
        %v1161 = vunpack.c.l.b16 %v1123
        %v1162 = vunpack.c.h.b16 %v1123
        %v1163 = vunpack.c.l.b16 %v1124
        %v1164 = vunpack.c.h.b16 %v1124
        %v1165 = vunpack.c.l.b16 %v1125
        %v1166 = vunpack.c.h.b16 %v1125
        %v1167 = vunpack.c.l.b16 %v1126
        %v1168 = vunpack.c.h.b16 %v1126
        %v1169 = vunpack.c.l.b16 %v1127
        %v1170 = vunpack.c.h.b16 %v1127
        %v1171 = vunpack.c.l.b16 %v1128
        %v1172 = vunpack.c.h.b16 %v1128
        %v1173 = vunpack.c.l.b16 %v1129
        %v1174 = vunpack.c.h.b16 %v1129
        %v1175 = vunpack.c.l.b16 %v1130
        %v1176 = vunpack.c.h.b16 %v1130
        %v1177 = vunpack.c.l.b16 %v1131
        %v1178 = vunpack.c.h.b16 %v1131
        %v1179 = vunpack.c.l.b16 %v1132
        %v1180 = vunpack.c.h.b16 %v1132
        %v1181 = vpack.c.b16 %v1149, %v1149
        %v1182 = vpack.c.b16 %v1150, %v1150
        %v1183 = vpack.c.b16 %v1151, %v1151
        %v1184 = vpack.c.b16 %v1152, %v1152
        %v1185 = vpack.c.b16 %v1153, %v1153
        %v1186 = vpack.c.b16 %v1154, %v1154
        %v1187 = vpack.c.b16 %v1155, %v1155
        %v1188 = vpack.c.b16 %v1156, %v1156
        %v1189 = vpack.c.b16 %v1157, %v1157
        %v1190 = vpack.c.b16 %v1158, %v1158
        %v1191 = vpack.c.b16 %v1159, %v1159
        %v1192 = vpack.c.b16 %v1160, %v1160
        %v1193 = vpack.c.b16 %v1161, %v1161
        %v1194 = vpack.c.b16 %v1162, %v1162
        %v1195 = vpack.c.b16 %v1163, %v1163
        %v1196 = vpack.c.b16 %v1164, %v1164
        %v1197 = vpack.c.b16 %v1165, %v1165
        %v1198 = vpack.c.b16 %v1166, %v1166
        %v1199 = vpack.c.b16 %v1167, %v1167
        %v1200 = vpack.c.b16 %v1168, %v1168
        %v1201 = vpack.c.b16 %v1169, %v1169
        %v1202 = vpack.c.b16 %v1170, %v1170
        %v1203 = vpack.c.b16 %v1171, %v1171
        %v1204 = vpack.c.b16 %v1172, %v1172
        %v1205 = vpack.c.b16 %v1173, %v1173
        %v1206 = vpack.c.b16 %v1174, %v1174
        %v1207 = vpack.c.b16 %v1175, %v1175
        %v1208 = vpack.c.b16 %v1176, %v1176
        %v1209 = vpack.c.b16 %v1177, %v1177
        %v1210 = vpack.c.b16 %v1178, %v1178
        %v1211 = vpack.c.b16 %v1179, %v1179
        %v1212 = vpack.c.b16 %v1180, %v1180
        %1245 = vst [vmem:[%s337] sm:$0xf] %v1181
        %1246 = vst [vmem:[%s337 + $0x4] sm:$0xf] %v1182
        %1247 = vst [vmem:[%s337 + $0x8] sm:$0xf] %v1183
        %1248 = vst [vmem:[%s337 + $0xc] sm:$0xf] %v1184
        %1249 = vst [vmem:[%s337 + $0x10] sm:$0xf] %v1185
        %1250 = vst [vmem:[%s337 + $0x14] sm:$0xf] %v1186
        %1251 = vst [vmem:[%s337 + $0x18] sm:$0xf] %v1187
        %1252 = vst [vmem:[%s337 + $0x1c] sm:$0xf] %v1188
        %1253 = vst [vmem:[%s337 + $0x20] sm:$0xf] %v1189
        %1254 = vst [vmem:[%s337 + $0x24] sm:$0xf] %v1190
        %1255 = vst [vmem:[%s337 + $0x28] sm:$0xf] %v1191
        %1256 = vst [vmem:[%s337 + $0x2c] sm:$0xf] %v1192
        %1257 = vst [vmem:[%s337 + $0x30] sm:$0xf] %v1193
        %1258 = vst [vmem:[%s337 + $0x34] sm:$0xf] %v1194
        %1259 = vst [vmem:[%s337 + $0x38] sm:$0xf] %v1195
        %1260 = vst [vmem:[%s337 + $0x3c] sm:$0xf] %v1196
        %1261 = vst [vmem:[%s337 + $0x40] sm:$0xf] %v1197
        %1262 = vst [vmem:[%s337 + $0x44] sm:$0xf] %v1198
        %1263 = vst [vmem:[%s337 + $0x48] sm:$0xf] %v1199
        %1264 = vst [vmem:[%s337 + $0x4c] sm:$0xf] %v1200
        %1265 = vst [vmem:[%s337 + $0x50] sm:$0xf] %v1201
        %1266 = vst [vmem:[%s337 + $0x54] sm:$0xf] %v1202
        %1267 = vst [vmem:[%s337 + $0x58] sm:$0xf] %v1203
        %1268 = vst [vmem:[%s337 + $0x5c] sm:$0xf] %v1204
        %1269 = vst [vmem:[%s337 + $0x60] sm:$0xf] %v1205
        %1270 = vst [vmem:[%s337 + $0x64] sm:$0xf] %v1206
        %1271 = vst [vmem:[%s337 + $0x68] sm:$0xf] %v1207
        %1272 = vst [vmem:[%s337 + $0x6c] sm:$0xf] %v1208
        %1273 = vst [vmem:[%s337 + $0x70] sm:$0xf] %v1209
        %1274 = vst [vmem:[%s337 + $0x74] sm:$0xf] %v1210
        %1275 = vst [vmem:[%s337 + $0x78] sm:$0xf] %v1211
        %1276 = vst [vmem:[%s337 + $0x7c] sm:$0xf] %v1212
        %v1277 = vld [vmem:[%s4] sm:$0xf]
        %v1278 = vld [vmem:[%s4 + $0x4] sm:$0xf]
        %v1279 = vld [vmem:[%s4 + $0x8] sm:$0xf]
        %v1280 = vld [vmem:[%s4 + $0xc] sm:$0xf]
        %v1281 = vld [vmem:[%s4 + $0x10] sm:$0xf]
        %v1282 = vld [vmem:[%s4 + $0x14] sm:$0xf]
        %v1283 = vld [vmem:[%s4 + $0x18] sm:$0xf]
        %v1284 = vld [vmem:[%s4 + $0x1c] sm:$0xf]
        %v1285 = vld [vmem:[%s4 + $0x20] sm:$0xf]
        %v1286 = vld [vmem:[%s4 + $0x24] sm:$0xf]
        %v1287 = vld [vmem:[%s4 + $0x28] sm:$0xf]
        %v1288 = vld [vmem:[%s4 + $0x2c] sm:$0xf]
        %v1289 = vld [vmem:[%s4 + $0x30] sm:$0xf]
        %v1290 = vld [vmem:[%s4 + $0x34] sm:$0xf]
        %v1291 = vld [vmem:[%s4 + $0x38] sm:$0xf]
        %v1292 = vld [vmem:[%s4 + $0x3c] sm:$0xf]
        %v1309 = vunpack.c.l.b16 %v1277
        %v1310 = vunpack.c.l.b16 %v1278
        %v1311 = vunpack.c.l.b16 %v1279
        %v1312 = vunpack.c.l.b16 %v1280
        %v1313 = vunpack.c.l.b16 %v1281
        %v1314 = vunpack.c.l.b16 %v1282
        %v1315 = vunpack.c.l.b16 %v1283
        %v1316 = vunpack.c.l.b16 %v1284
        %v1317 = vunpack.c.l.b16 %v1285
        %v1318 = vunpack.c.l.b16 %v1286
        %v1319 = vunpack.c.l.b16 %v1287
        %v1320 = vunpack.c.l.b16 %v1288
        %v1321 = vunpack.c.l.b16 %v1289
        %v1322 = vunpack.c.l.b16 %v1290
        %v1323 = vunpack.c.l.b16 %v1291
        %v1324 = vunpack.c.l.b16 %v1292
        %v1325 = vpack.c.b16 %v1310, %v1309
        %v1326 = vpack.c.b16 %v1312, %v1311
        %v1327 = vpack.c.b16 %v1314, %v1313
        %v1328 = vpack.c.b16 %v1316, %v1315
        %v1329 = vpack.c.b16 %v1318, %v1317
        %v1330 = vpack.c.b16 %v1320, %v1319
        %v1331 = vpack.c.b16 %v1322, %v1321
        %v1332 = vpack.c.b16 %v1324, %v1323
        %1341 = vmatprep.subr.bf16.mxu0 0
        %1342 = vmatpush1.bf16.msra.mxu0 %v1332
        %1343 = vmatprep.subr.bf16.mxu0 0
        %1344 = vmatpush1.bf16.msra.mxu0 %v1331
        %1345 = vmatprep.subr.bf16.mxu0 0
        %1346 = vmatpush1.bf16.msra.mxu0 %v1330
        %1347 = vmatprep.subr.bf16.mxu0 0
        %1348 = vmatpush1.bf16.msra.mxu0 %v1329
        %1349 = vmatprep.subr.bf16.mxu0 0
        %1350 = vmatpush1.bf16.msra.mxu0 %v1328
        %1351 = vmatprep.subr.bf16.mxu0 0
        %1352 = vmatpush1.bf16.msra.mxu0 %v1327
        %1353 = vmatprep.subr.bf16.mxu0 0
        %1354 = vmatpush1.bf16.msra.mxu0 %v1326
        %1355 = vmatprep.subr.bf16.mxu0 0
        %1356 = vmatpush1.bf16.msra.mxu0 %v1325
        %1357 = vmatprep.subr.bf16.mxu0 0
        %1358 = vmatpush2.bf16.msra.mxu0 0
        %1359 = vmatprep.subr.bf16.mxu0 0
        %1360 = vmatpush2.bf16.msra.mxu0 0
        %1361 = vmatprep.subr.bf16.mxu0 0
        %1362 = vmatpush2.bf16.msra.mxu0 0
        %1363 = vmatprep.subr.bf16.mxu0 0
        %1364 = vmatpush2.bf16.msra.mxu0 0
        %1365 = vmatprep.subr.bf16.mxu0 0
        %1366 = vmatpush2.bf16.msra.mxu0 0
        %1367 = vmatprep.subr.bf16.mxu0 0
        %1368 = vmatpush2.bf16.msra.mxu0 0
        %1369 = vmatprep.subr.bf16.mxu0 0
        %1370 = vmatpush2.bf16.msra.mxu0 0
        %1371 = vmatprep.subr.bf16.mxu0 0
        %1372 = vmatpush2.bf16.msra.mxu0 0
        %1373 = vmatprep.mubr.bf16.mxu0 0
        %1374 = vmatmul.mubr.bf16.gmra.mxu0 %v957
        %v1375 = vpop.f32.mrf.mxu0
        %v1376 = vadd.f32 0.0, %v1375
        %v1377 = vpop.f32.mrf.mxu0
        %v1378 = vpop.f32.mrf.mxu0
        %v1379 = vadd.f32 0.0, %v1378
        %v1380 = vpop.f32.mrf.mxu0
        %1381 = vmatprep.mubr.bf16.mxu0 0
        %1382 = vmatmul.mubr.bf16.gmra.mxu0 %v958
        %v1383 = vpop.f32.mrf.mxu0
        %v1384 = vadd.f32 0.0, %v1383
        %v1385 = vpop.f32.mrf.mxu0
        %v1386 = vpop.f32.mrf.mxu0
        %v1387 = vadd.f32 0.0, %v1386
        %v1388 = vpop.f32.mrf.mxu0
        %1389 = vmatprep.mubr.bf16.mxu0 0
        %1390 = vmatmul.mubr.bf16.gmra.mxu0 %v959
        %v1391 = vpop.f32.mrf.mxu0
        %v1392 = vadd.f32 0.0, %v1391
        %v1393 = vpop.f32.mrf.mxu0
        %v1394 = vpop.f32.mrf.mxu0
        %v1395 = vadd.f32 0.0, %v1394
        %v1396 = vpop.f32.mrf.mxu0
        %1397 = vmatprep.mubr.bf16.mxu0 0
        %1398 = vmatmul.mubr.bf16.gmra.mxu0 %v960
        %v1399 = vpop.f32.mrf.mxu0
        %v1400 = vadd.f32 0.0, %v1399
        %v1401 = vpop.f32.mrf.mxu0
        %v1402 = vpop.f32.mrf.mxu0
        %v1403 = vadd.f32 0.0, %v1402
        %v1404 = vpop.f32.mrf.mxu0
        %1405 = vmatprep.mubr.bf16.mxu0 0
        %1406 = vmatmul.mubr.bf16.gmra.mxu0 %v961
        %v1407 = vpop.f32.mrf.mxu0
        %v1408 = vadd.f32 0.0, %v1407
        %v1409 = vpop.f32.mrf.mxu0
        %v1410 = vpop.f32.mrf.mxu0
        %v1411 = vadd.f32 0.0, %v1410
        %v1412 = vpop.f32.mrf.mxu0
        %1413 = vmatprep.mubr.bf16.mxu0 0
        %1414 = vmatmul.mubr.bf16.gmra.mxu0 %v962
        %v1415 = vpop.f32.mrf.mxu0
        %v1416 = vadd.f32 0.0, %v1415
        %v1417 = vpop.f32.mrf.mxu0
        %v1418 = vpop.f32.mrf.mxu0
        %v1419 = vadd.f32 0.0, %v1418
        %v1420 = vpop.f32.mrf.mxu0
        %1421 = vmatprep.mubr.bf16.mxu0 0
        %1422 = vmatmul.mubr.bf16.gmra.mxu0 %v963
        %v1423 = vpop.f32.mrf.mxu0
        %v1424 = vadd.f32 0.0, %v1423
        %v1425 = vpop.f32.mrf.mxu0
        %v1426 = vpop.f32.mrf.mxu0
        %v1427 = vadd.f32 0.0, %v1426
        %v1428 = vpop.f32.mrf.mxu0
        %1429 = vmatprep.mubr.bf16.mxu0 0
        %1430 = vmatmul.mubr.bf16.gmra.mxu0 %v964
        %v1431 = vpop.f32.mrf.mxu0
        %v1432 = vadd.f32 0.0, %v1431
        %v1433 = vpop.f32.mrf.mxu0
        %v1434 = vpop.f32.mrf.mxu0
        %v1435 = vadd.f32 0.0, %v1434
        %v1436 = vpop.f32.mrf.mxu0
        %1437 = vmatprep.mubr.bf16.mxu0 0
        %1438 = vmatmul.mubr.bf16.gmra.mxu0 %v965
        %v1439 = vpop.f32.mrf.mxu0
        %v1440 = vadd.f32 0.0, %v1439
        %v1441 = vpop.f32.mrf.mxu0
        %v1442 = vpop.f32.mrf.mxu0
        %v1443 = vadd.f32 0.0, %v1442
        %v1444 = vpop.f32.mrf.mxu0
        %1445 = vmatprep.mubr.bf16.mxu0 0
        %1446 = vmatmul.mubr.bf16.gmra.mxu0 %v966
        %v1447 = vpop.f32.mrf.mxu0
        %v1448 = vadd.f32 0.0, %v1447
        %v1449 = vpop.f32.mrf.mxu0
        %v1450 = vpop.f32.mrf.mxu0
        %v1451 = vadd.f32 0.0, %v1450
        %v1452 = vpop.f32.mrf.mxu0
        %1453 = vmatprep.mubr.bf16.mxu0 0
        %1454 = vmatmul.mubr.bf16.gmra.mxu0 %v967
        %v1455 = vpop.f32.mrf.mxu0
        %v1456 = vadd.f32 0.0, %v1455
        %v1457 = vpop.f32.mrf.mxu0
        %v1458 = vpop.f32.mrf.mxu0
        %v1459 = vadd.f32 0.0, %v1458
        %v1460 = vpop.f32.mrf.mxu0
        %1461 = vmatprep.mubr.bf16.mxu0 0
        %1462 = vmatmul.mubr.bf16.gmra.mxu0 %v968
        %v1463 = vpop.f32.mrf.mxu0
        %v1464 = vadd.f32 0.0, %v1463
        %v1465 = vpop.f32.mrf.mxu0
        %v1466 = vpop.f32.mrf.mxu0
        %v1467 = vadd.f32 0.0, %v1466
        %v1468 = vpop.f32.mrf.mxu0
        %1469 = vmatprep.mubr.bf16.mxu0 0
        %1470 = vmatmul.mubr.bf16.gmra.mxu0 %v969
        %v1471 = vpop.f32.mrf.mxu0
        %v1472 = vadd.f32 0.0, %v1471
        %v1473 = vpop.f32.mrf.mxu0
        %v1474 = vpop.f32.mrf.mxu0
        %v1475 = vadd.f32 0.0, %v1474
        %v1476 = vpop.f32.mrf.mxu0
        %1477 = vmatprep.mubr.bf16.mxu0 0
        %1478 = vmatmul.mubr.bf16.gmra.mxu0 %v970
        %v1479 = vpop.f32.mrf.mxu0
        %v1480 = vadd.f32 0.0, %v1479
        %v1481 = vpop.f32.mrf.mxu0
        %v1482 = vpop.f32.mrf.mxu0
        %v1483 = vadd.f32 0.0, %v1482
        %v1484 = vpop.f32.mrf.mxu0
        %1485 = vmatprep.mubr.bf16.mxu0 0
        %1486 = vmatmul.mubr.bf16.gmra.mxu0 %v971
        %v1487 = vpop.f32.mrf.mxu0
        %v1488 = vadd.f32 0.0, %v1487
        %v1489 = vpop.f32.mrf.mxu0
        %v1490 = vpop.f32.mrf.mxu0
        %v1491 = vadd.f32 0.0, %v1490
        %v1492 = vpop.f32.mrf.mxu0
        %1493 = vmatprep.mubr.bf16.mxu0 0
        %1494 = vmatmul.mubr.bf16.gmra.mxu0 %v972
        %v1495 = vpop.f32.mrf.mxu0
        %v1496 = vadd.f32 0.0, %v1495
        %v1497 = vpop.f32.mrf.mxu0
        %v1498 = vpop.f32.mrf.mxu0
        %v1499 = vadd.f32 0.0, %v1498
        %v1500 = vpop.f32.mrf.mxu0
        %1501 = vdwg.mxu0
        %v1502 = vld [vmem:[%s5] sm:$0x1]
        %v1504 = vlaneseq
        %v1505 = vshrl.u32 %v1504, 7
        %v1506 = vsub.s32 0, %v1505
        %v1507 = vrot.slane %v1502, %v1506
        %v1509 = vmul.f32 %v1376, %v1507
        %v1510 = vmul.f32 %v1379, %v1507
        %v1511 = vmul.f32 %v1384, %v1507
        %v1512 = vmul.f32 %v1387, %v1507
        %v1513 = vmul.f32 %v1392, %v1507
        %v1514 = vmul.f32 %v1395, %v1507
        %v1515 = vmul.f32 %v1400, %v1507
        %v1516 = vmul.f32 %v1403, %v1507
        %v1517 = vmul.f32 %v1408, %v1507
        %v1518 = vmul.f32 %v1411, %v1507
        %v1519 = vmul.f32 %v1416, %v1507
        %v1520 = vmul.f32 %v1419, %v1507
        %v1521 = vmul.f32 %v1424, %v1507
        %v1522 = vmul.f32 %v1427, %v1507
        %v1523 = vmul.f32 %v1432, %v1507
        %v1524 = vmul.f32 %v1435, %v1507
        %v1525 = vmul.f32 %v1440, %v1507
        %v1526 = vmul.f32 %v1443, %v1507
        %v1527 = vmul.f32 %v1448, %v1507
        %v1528 = vmul.f32 %v1451, %v1507
        %v1529 = vmul.f32 %v1456, %v1507
        %v1530 = vmul.f32 %v1459, %v1507
        %v1531 = vmul.f32 %v1464, %v1507
        %v1532 = vmul.f32 %v1467, %v1507
        %v1533 = vmul.f32 %v1472, %v1507
        %v1534 = vmul.f32 %v1475, %v1507
        %v1535 = vmul.f32 %v1480, %v1507
        %v1536 = vmul.f32 %v1483, %v1507
        %v1537 = vmul.f32 %v1488, %v1507
        %v1538 = vmul.f32 %v1491, %v1507
        %v1539 = vmul.f32 %v1496, %v1507
        %v1540 = vmul.f32 %v1499, %v1507
        %v1541 = vld [vmem:[%s6] sm:$0x1]
        %v1543 = vlaneseq
        %v1544 = vshrl.u32 %v1543, 7
        %v1545 = vsub.s32 0, %v1544
        %v1546 = vrot.slane %v1541, %v1545
        %v1548 = vadd.f32 %v1509, %v1546
        %v1549 = vadd.f32 %v1510, %v1546
        %v1550 = vadd.f32 %v1511, %v1546
        %v1551 = vadd.f32 %v1512, %v1546
        %v1552 = vadd.f32 %v1513, %v1546
        %v1553 = vadd.f32 %v1514, %v1546
        %v1554 = vadd.f32 %v1515, %v1546
        %v1555 = vadd.f32 %v1516, %v1546
        %v1556 = vadd.f32 %v1517, %v1546
        %v1557 = vadd.f32 %v1518, %v1546
        %v1558 = vadd.f32 %v1519, %v1546
        %v1559 = vadd.f32 %v1520, %v1546
        %v1560 = vadd.f32 %v1521, %v1546
        %v1561 = vadd.f32 %v1522, %v1546
        %v1562 = vadd.f32 %v1523, %v1546
        %v1563 = vadd.f32 %v1524, %v1546
        %v1564 = vadd.f32 %v1525, %v1546
        %v1565 = vadd.f32 %v1526, %v1546
        %v1566 = vadd.f32 %v1527, %v1546
        %v1567 = vadd.f32 %v1528, %v1546
        %v1568 = vadd.f32 %v1529, %v1546
        %v1569 = vadd.f32 %v1530, %v1546
        %v1570 = vadd.f32 %v1531, %v1546
        %v1571 = vadd.f32 %v1532, %v1546
        %v1572 = vadd.f32 %v1533, %v1546
        %v1573 = vadd.f32 %v1534, %v1546
        %v1574 = vadd.f32 %v1535, %v1546
        %v1575 = vadd.f32 %v1536, %v1546
        %v1576 = vadd.f32 %v1537, %v1546
        %v1577 = vadd.f32 %v1538, %v1546
        %v1578 = vadd.f32 %v1539, %v1546
        %v1579 = vadd.f32 %v1540, %v1546
        %v1580 = vmax.f32 %v1548, 0.0
        %v1581 = vmax.f32 %v1549, 0.0
        %v1582 = vmax.f32 %v1550, 0.0
        %v1583 = vmax.f32 %v1551, 0.0
        %v1584 = vmax.f32 %v1552, 0.0
        %v1585 = vmax.f32 %v1553, 0.0
        %v1586 = vmax.f32 %v1554, 0.0
        %v1587 = vmax.f32 %v1555, 0.0
        %v1588 = vmax.f32 %v1556, 0.0
        %v1589 = vmax.f32 %v1557, 0.0
        %v1590 = vmax.f32 %v1558, 0.0
        %v1591 = vmax.f32 %v1559, 0.0
        %v1592 = vmax.f32 %v1560, 0.0
        %v1593 = vmax.f32 %v1561, 0.0
        %v1594 = vmax.f32 %v1562, 0.0
        %v1595 = vmax.f32 %v1563, 0.0
        %v1596 = vmax.f32 %v1564, 0.0
        %v1597 = vmax.f32 %v1565, 0.0
        %v1598 = vmax.f32 %v1566, 0.0
        %v1599 = vmax.f32 %v1567, 0.0
        %v1600 = vmax.f32 %v1568, 0.0
        %v1601 = vmax.f32 %v1569, 0.0
        %v1602 = vmax.f32 %v1570, 0.0
        %v1603 = vmax.f32 %v1571, 0.0
        %v1604 = vmax.f32 %v1572, 0.0
        %v1605 = vmax.f32 %v1573, 0.0
        %v1606 = vmax.f32 %v1574, 0.0
        %v1607 = vmax.f32 %v1575, 0.0
        %v1608 = vmax.f32 %v1576, 0.0
        %v1609 = vmax.f32 %v1577, 0.0
        %v1610 = vmax.f32 %v1578, 0.0
        %v1611 = vmax.f32 %v1579, 0.0
        %v1612 = vpack.c.bf16 %v1581, %v1580
        %v1613 = vpack.c.bf16 %v1583, %v1582
        %v1614 = vpack.c.bf16 %v1585, %v1584
        %v1615 = vpack.c.bf16 %v1587, %v1586
        %v1616 = vpack.c.bf16 %v1589, %v1588
        %v1617 = vpack.c.bf16 %v1591, %v1590
        %v1618 = vpack.c.bf16 %v1593, %v1592
        %v1619 = vpack.c.bf16 %v1595, %v1594
        %v1620 = vpack.c.bf16 %v1597, %v1596
        %v1621 = vpack.c.bf16 %v1599, %v1598
        %v1622 = vpack.c.bf16 %v1601, %v1600
        %v1623 = vpack.c.bf16 %v1603, %v1602
        %v1624 = vpack.c.bf16 %v1605, %v1604
        %v1625 = vpack.c.bf16 %v1607, %v1606
        %v1626 = vpack.c.bf16 %v1609, %v1608
        %v1627 = vpack.c.bf16 %v1611, %v1610
        %v1644 = vunpack.c.l.b16 %v1612
        %v1645 = vunpack.c.h.b16 %v1612
        %v1646 = vunpack.c.l.b16 %v1613
        %v1647 = vunpack.c.h.b16 %v1613
        %v1648 = vunpack.c.l.b16 %v1614
        %v1649 = vunpack.c.h.b16 %v1614
        %v1650 = vunpack.c.l.b16 %v1615
        %v1651 = vunpack.c.h.b16 %v1615
        %v1652 = vunpack.c.l.b16 %v1616
        %v1653 = vunpack.c.h.b16 %v1616
        %v1654 = vunpack.c.l.b16 %v1617
        %v1655 = vunpack.c.h.b16 %v1617
        %v1656 = vunpack.c.l.b16 %v1618
        %v1657 = vunpack.c.h.b16 %v1618
        %v1658 = vunpack.c.l.b16 %v1619
        %v1659 = vunpack.c.h.b16 %v1619
        %v1660 = vunpack.c.l.b16 %v1620
        %v1661 = vunpack.c.h.b16 %v1620
        %v1662 = vunpack.c.l.b16 %v1621
        %v1663 = vunpack.c.h.b16 %v1621
        %v1664 = vunpack.c.l.b16 %v1622
        %v1665 = vunpack.c.h.b16 %v1622
        %v1666 = vunpack.c.l.b16 %v1623
        %v1667 = vunpack.c.h.b16 %v1623
        %v1668 = vunpack.c.l.b16 %v1624
        %v1669 = vunpack.c.h.b16 %v1624
        %v1670 = vunpack.c.l.b16 %v1625
        %v1671 = vunpack.c.h.b16 %v1625
        %v1672 = vunpack.c.l.b16 %v1626
        %v1673 = vunpack.c.h.b16 %v1626
        %v1674 = vunpack.c.l.b16 %v1627
        %v1675 = vunpack.c.h.b16 %v1627
        %v1676 = vpack.c.b16 %v1644, %v1644
        %v1677 = vpack.c.b16 %v1645, %v1645
        %v1678 = vpack.c.b16 %v1646, %v1646
        %v1679 = vpack.c.b16 %v1647, %v1647
        %v1680 = vpack.c.b16 %v1648, %v1648
        %v1681 = vpack.c.b16 %v1649, %v1649
        %v1682 = vpack.c.b16 %v1650, %v1650
        %v1683 = vpack.c.b16 %v1651, %v1651
        %v1684 = vpack.c.b16 %v1652, %v1652
        %v1685 = vpack.c.b16 %v1653, %v1653
        %v1686 = vpack.c.b16 %v1654, %v1654
        %v1687 = vpack.c.b16 %v1655, %v1655
        %v1688 = vpack.c.b16 %v1656, %v1656
        %v1689 = vpack.c.b16 %v1657, %v1657
        %v1690 = vpack.c.b16 %v1658, %v1658
        %v1691 = vpack.c.b16 %v1659, %v1659
        %v1692 = vpack.c.b16 %v1660, %v1660
        %v1693 = vpack.c.b16 %v1661, %v1661
        %v1694 = vpack.c.b16 %v1662, %v1662
        %v1695 = vpack.c.b16 %v1663, %v1663
        %v1696 = vpack.c.b16 %v1664, %v1664
        %v1697 = vpack.c.b16 %v1665, %v1665
        %v1698 = vpack.c.b16 %v1666, %v1666
        %v1699 = vpack.c.b16 %v1667, %v1667
        %v1700 = vpack.c.b16 %v1668, %v1668
        %v1701 = vpack.c.b16 %v1669, %v1669
        %v1702 = vpack.c.b16 %v1670, %v1670
        %v1703 = vpack.c.b16 %v1671, %v1671
        %v1704 = vpack.c.b16 %v1672, %v1672
        %v1705 = vpack.c.b16 %v1673, %v1673
        %v1706 = vpack.c.b16 %v1674, %v1674
        %v1707 = vpack.c.b16 %v1675, %v1675
        %1740 = vst [vmem:[%s344] sm:$0xf] %v1676
        %1741 = vst [vmem:[%s344 + $0x4] sm:$0xf] %v1677
        %1742 = vst [vmem:[%s344 + $0x8] sm:$0xf] %v1678
        %1743 = vst [vmem:[%s344 + $0xc] sm:$0xf] %v1679
        %1744 = vst [vmem:[%s344 + $0x10] sm:$0xf] %v1680
        %1745 = vst [vmem:[%s344 + $0x14] sm:$0xf] %v1681
        %1746 = vst [vmem:[%s344 + $0x18] sm:$0xf] %v1682
        %1747 = vst [vmem:[%s344 + $0x1c] sm:$0xf] %v1683
        %1748 = vst [vmem:[%s344 + $0x20] sm:$0xf] %v1684
        %1749 = vst [vmem:[%s344 + $0x24] sm:$0xf] %v1685
        %1750 = vst [vmem:[%s344 + $0x28] sm:$0xf] %v1686
        %1751 = vst [vmem:[%s344 + $0x2c] sm:$0xf] %v1687
        %1752 = vst [vmem:[%s344 + $0x30] sm:$0xf] %v1688
        %1753 = vst [vmem:[%s344 + $0x34] sm:$0xf] %v1689
        %1754 = vst [vmem:[%s344 + $0x38] sm:$0xf] %v1690
        %1755 = vst [vmem:[%s344 + $0x3c] sm:$0xf] %v1691
        %1756 = vst [vmem:[%s344 + $0x40] sm:$0xf] %v1692
        %1757 = vst [vmem:[%s344 + $0x44] sm:$0xf] %v1693
        %1758 = vst [vmem:[%s344 + $0x48] sm:$0xf] %v1694
        %1759 = vst [vmem:[%s344 + $0x4c] sm:$0xf] %v1695
        %1760 = vst [vmem:[%s344 + $0x50] sm:$0xf] %v1696
        %1761 = vst [vmem:[%s344 + $0x54] sm:$0xf] %v1697
        %1762 = vst [vmem:[%s344 + $0x58] sm:$0xf] %v1698
        %1763 = vst [vmem:[%s344 + $0x5c] sm:$0xf] %v1699
        %1764 = vst [vmem:[%s344 + $0x60] sm:$0xf] %v1700
        %1765 = vst [vmem:[%s344 + $0x64] sm:$0xf] %v1701
        %1766 = vst [vmem:[%s344 + $0x68] sm:$0xf] %v1702
        %1767 = vst [vmem:[%s344 + $0x6c] sm:$0xf] %v1703
        %1768 = vst [vmem:[%s344 + $0x70] sm:$0xf] %v1704
        %1769 = vst [vmem:[%s344 + $0x74] sm:$0xf] %v1705
        %1770 = vst [vmem:[%s344 + $0x78] sm:$0xf] %v1706
        %1771 = vst [vmem:[%s344 + $0x7c] sm:$0xf] %v1707
        %s1772 = sand.u32 %s187, 1
        %s1773 = scalar_lea.sflag [#allocation3], %s1772
        %s1774 = sand.u32 %s187, 1
        %s1775 = smul.addr %s1774, 128
        %s1776 = scalar_lea.vmem [#allocation2], %s1775
        %s1777 = sand.u32 %s27, 1
        %s1778 = scalar_lea.sflag [#allocation5], %s1777
        %s1779 = sand.u32 %s213, 1
        %s1780 = smul.addr %s1779, 128
        %s1781 = scalar_lea.vmem [#allocation4], %s1780
        %s1782 = sand.u32 %s27, 1
        %s1783 = scalar_lea.sflag [#allocation5], %s1782
        %s1784 = sand.u32 %s239, 1
        %s1785 = smul.addr %s1784, 128
        %s1786 = scalar_lea.vmem [#allocation6], %s1785
        // Predicated region
        $region49: #{tpu_custom_call.1} parent=47 // pred_check
          %p1787 = pneg %p197
        $region50: #{tpu_custom_call.1} parent=47 // pred_check_branch
          %1789 = sbr.rel (%p1787) target = $region52
        $region51: #{tpu_custom_call.1} parent=47 // pred_region
          %s1790 = smul.u32 32, %s27
          %s1792 = ssub.s32 2048, 2048
          %1793 = vsyncadd %s1773, %s1792
          %s1794 = smul.addr %s1790, 64
          %s1795 = scalar_lea.hbm %s7, %s1794
          %s1796 = sshll.u32 %s1776, 4
          %s1797 = int_to_ptr.vmem [resolvable:$true] %s1796
          %1802 = dma.vmem_to_hbm [thread:$0]  %s1797, 2048, %s1795, %s1773, 64, 64, 4
        $region52: #{tpu_custom_call.1} parent=47 // pred_fallthru
          _
        // Predicated region
        $region53: #{tpu_custom_call.1} parent=47 // pred_check
          %p1803 = pneg %p223
        $region54: #{tpu_custom_call.1} parent=47 // pred_check_branch
          %1805 = sbr.rel (%p1803) target = $region56
        $region55: #{tpu_custom_call.1} parent=47 // pred_region
          %s1806 = smul.u32 32, %s27
          %s1808 = ssub.s32 2048, 2048
          %1809 = vsyncadd %s1778, %s1808
          %s1810 = smul.addr %s1806, 64
          %s1811 = scalar_lea.hbm %s8, %s1810
          %s1812 = sshll.u32 %s1781, 4
          %s1813 = int_to_ptr.vmem [resolvable:$true] %s1812
          %1818 = dma.vmem_to_hbm [thread:$0]  %s1813, 2048, %s1811, %s1778, 64, 64, 4
        $region56: #{tpu_custom_call.1} parent=47 // pred_fallthru
          _
        // Predicated region
        $region57: #{tpu_custom_call.1} parent=47 // pred_check
          %p1819 = pneg %p249
        $region58: #{tpu_custom_call.1} parent=47 // pred_check_branch
          %1821 = sbr.rel (%p1819) target = $region60
        $region59: #{tpu_custom_call.1} parent=47 // pred_region
          %s1822 = smul.u32 32, %s27
          %s1824 = ssub.s32 2048, 2048
          %1825 = vsyncadd %s1783, %s1824
          %s1826 = smul.addr %s1822, 64
          %s1827 = scalar_lea.hbm %s9, %s1826
          %s1828 = sshll.u32 %s1786, 4
          %s1829 = int_to_ptr.vmem [resolvable:$true] %s1828
          %1834 = dma.vmem_to_hbm [thread:$0]  %s1829, 2048, %s1827, %s1783, 64, 64, 4
        $region60: #{tpu_custom_call.1} parent=47 // pred_fallthru
          _
      $region48: #{tpu_custom_call.1} parent=5 // pred_fallthru
        _
      %p1835 = scmp.le.s32.totalorder 2, %s22
      // Predicated region
      $region61: #{tpu_custom_call.1} parent=5 // pred_check
        %p1836 = pneg %p1835
      $region62: #{tpu_custom_call.1} parent=5 // pred_check_branch
        %1838 = sbr.rel (%p1836) target = $region64
      $region63: #{tpu_custom_call.1} parent=5 // pred_region
        %s1839 = ssub.s32 %s22, 2
        // Predicated region
        $region65: #{tpu_custom_call.1} parent=63 // pred_check
          %p1840 = pneg %p203
        $region66: #{tpu_custom_call.1} parent=63 // pred_check_branch
          %1842 = sbr.rel (%p1840) target = $region68
        $region67: #{tpu_custom_call.1} parent=63 // pred_region
          %s1843 = sand.u32 %s188, 1
          %s1844 = scalar_lea.sflag [#allocation3], %s1843
          %s1845 = sand.u32 %s188, 1
          %s1846 = smul.addr %s1845, 128
          %s1847 = scalar_lea.vmem [#allocation2], %s1846
          %1848 = dma.done %s1844, 2048
        $region68: #{tpu_custom_call.1} parent=63 // pred_fallthru
          _
        // Predicated region
        $region69: #{tpu_custom_call.1} parent=63 // pred_check
          %p1849 = pneg %p229
        $region70: #{tpu_custom_call.1} parent=63 // pred_check_branch
          %1851 = sbr.rel (%p1849) target = $region72
        $region71: #{tpu_custom_call.1} parent=63 // pred_region
          %s1852 = sand.u32 %s28, 1
          %s1853 = scalar_lea.sflag [#allocation5], %s1852
          %s1854 = sand.u32 %s214, 1
          %s1855 = smul.addr %s1854, 128
          %s1856 = scalar_lea.vmem [#allocation4], %s1855
          %1857 = dma.done %s1853, 2048
        $region72: #{tpu_custom_call.1} parent=63 // pred_fallthru
          _
        // Predicated region
        $region73: #{tpu_custom_call.1} parent=63 // pred_check
          %p1858 = pneg %p255
        $region74: #{tpu_custom_call.1} parent=63 // pred_check_branch
          %1860 = sbr.rel (%p1858) target = $region76
        $region75: #{tpu_custom_call.1} parent=63 // pred_region
          %s1861 = sand.u32 %s28, 1
          %s1862 = scalar_lea.sflag [#allocation5], %s1861
          %s1863 = sand.u32 %s240, 1
          %s1864 = smul.addr %s1863, 128
          %s1865 = scalar_lea.vmem [#allocation6], %s1864
          %1866 = dma.done %s1862, 2048
        $region76: #{tpu_custom_call.1} parent=63 // pred_fallthru
          _
      $region64: #{tpu_custom_call.1} parent=5 // pred_fallthru
        _
    $region6: #{tpu_custom_call.1} parent=1 // loop_footer
      %s26 = sadd.s32 1, %s22
    $region7: #{tpu_custom_call.1} parent=1 // loop_footer_branch
      %21 = sbr.rel target = $region3
    $region8: #{tpu_custom_call.1} parent=1 // loop_exit
      _
    %1867 = vsyncpa [#allocation3], 1
    %s1868 = scalar_lea.sflag [#allocation3], 1
    %1869 = vsyncpa %s1868, 1
    %1870 = vsyncpa [#allocation5], 1
    %s1871 = scalar_lea.sflag [#allocation5], 1
    %1872 = vsyncpa %s1871, 1

</llo_original>
